<compile_context>
chip_gen: v7x
topology: tpu7x:2x2x1
jax: 0.10.0
libtpu: 0.0.40
codegen_flags: <defaults>
</compile_context>

<pallas_src>
import math

import jax
import jax.numpy as jnp
from jax import lax
from jax.experimental import pallas as pl
from jax.experimental.pallas import tpu as pltpu

# ---------------- config (small, consistent with the module) ----------------
B = 2          # batch
T = 8          # sequence length (<= block_size)
C = 32         # n_embd
N_HEAD = 4     # n_head
HD = C // N_HEAD
LN_EPS = 1e-5

LANES = 4 * C                      # 128: lane width of both packed parameter slabs
# row offsets inside the packed weight slab (row-stacked, each lane-padded to LANES)
_WQKV_R0 = 0                       # (C, 3C)
_W1_R0 = C                         # (C, 4C)
_W2_R0 = 2 * C                     # (4C, C)
_WP_R0 = 2 * C + 4 * C             # (C, C)
_W_ROWS = _WP_R0 + C               # 224


def _layernorm(z, g, b):
    mu = jnp.mean(z, axis=-1, keepdims=True)
    var = jnp.mean((z - mu) ** 2, axis=-1, keepdims=True)
    return (z - mu) * lax.rsqrt(var + LN_EPS) * g + b


def _gelu_exact(z):
    # F.gelu default = exact erf formulation
    return 0.5 * z * (1.0 + lax.erf(z * (1.0 / math.sqrt(2.0))))


def block_kernel(
    x_ref,        # (B*T, C) f32   flattened residual slab
    w_ref,        # (224, 128) bf16 packed weights: wqkv | w1 | w2 | wp (row-stacked)
    vec_ref,      # (8, 128) f32   packed vectors: ln1g ln1b bqkv bp ln2g ln2b b1 b2
    out_ref,      # (B*T, C) f32
):
    x = x_ref[...]                                           # (BT, C)

    # ---- static slices of the packed parameter slabs (free views, tiny loads) ----
    ln1g = vec_ref[0:1, 0:C]
    ln1b = vec_ref[1:2, 0:C]
    bqkv = vec_ref[2:3, 0:3 * C]
    bp = vec_ref[3:4, 0:C]
    ln2g = vec_ref[4:5, 0:C]
    ln2b = vec_ref[5:6, 0:C]
    b1 = vec_ref[6:7, 0:4 * C]
    b2 = vec_ref[7:8, 0:C]

    wqkv = w_ref[_WQKV_R0:_WQKV_R0 + C, 0:3 * C]             # (C, 3C)  bf16
    w1 = w_ref[_W1_R0:_W1_R0 + C, 0:4 * C]                   # (C, 4C)  bf16
    w2 = w_ref[_W2_R0:_W2_R0 + 4 * C, 0:C]                   # (4C, C)  bf16
    wp = w_ref[_WP_R0:_WP_R0 + C, 0:C]                       # (C, C)   bf16

    # ---- ln1 ----
    h = _layernorm(x, ln1g, ln1b)

    # ---- fused QKV: one (BT, C) @ (C, 3C) matmul, bf16 operands / f32 accumulate ----
    qkv = jnp.dot(h.astype(jnp.bfloat16), wqkv,
                  preferred_element_type=jnp.float32) + bqkv
    q = qkv[:, 0 * C:1 * C]
    k = qkv[:, 1 * C:2 * C]
    v = qkv[:, 2 * C:3 * C]

    # additive causal mask, built once per call
    rows = lax.broadcasted_iota(jnp.int32, (T, T), 0)
    cols = lax.broadcasted_iota(jnp.int32, (T, T), 1)
    mask_add = jnp.where(rows >= cols, 0.0, -jnp.inf).astype(jnp.float32)

    scale = 1.0 / math.sqrt(HD)

    # ---- causal self-attention: static loops over batch and heads, all in vregs.
    # Per-head outputs are lane-concatenated (XLU, otherwise idle) so the output
    # projection is ONE matmul over the whole (BT, C) slab.
    y_batches = []
    for b in range(B):                       # per-batch 8-row (tile-aligned) slices
        r0 = b * T
        head_outs = []
        for hh in range(N_HEAD):
            lo = hh * HD
            qh = q[r0:r0 + T, lo:lo + HD].astype(jnp.bfloat16)
            kh = k[r0:r0 + T, lo:lo + HD].astype(jnp.bfloat16)
            vh = v[r0:r0 + T, lo:lo + HD].astype(jnp.bfloat16)
            # q @ k^T via dot_general (contract last dims) — no materialized transpose
            att = lax.dot_general(qh, kh, (((1,), (1,)), ((), ())),
                                  preferred_element_type=jnp.float32) * scale
            att = att + mask_add
            m = jnp.max(att, axis=-1, keepdims=True)
            e = jnp.exp(att - m)
            inv = pl.reciprocal(jnp.sum(e, axis=-1, keepdims=True), approx=True)
            p = (e * inv).astype(jnp.bfloat16)
            yh = jnp.dot(p, vh, preferred_element_type=jnp.float32)   # (T, HD)
            head_outs.append(yh)
        y_batches.append(jnp.concatenate(head_outs, axis=-1))          # (T, C)
    y = jnp.concatenate(y_batches, axis=0)                             # (BT, C)

    # single output projection for all rows / heads
    attn_out = jnp.dot(y.astype(jnp.bfloat16), wp,
                       preferred_element_type=jnp.float32) + bp

    x = x + attn_out

    # ---- ln2 + MLP (bf16 MXU operands, f32 accumulation / elementwise) ----
    h2 = _layernorm(x, ln2g, ln2b)
    m1 = jnp.dot(h2.astype(jnp.bfloat16), w1,
                 preferred_element_type=jnp.float32) + b1
    m1 = _gelu_exact(m1)
    m2 = jnp.dot(m1.astype(jnp.bfloat16), w2,
                 preferred_element_type=jnp.float32) + b2

    # single lane-slab store of the whole (BT, C) result
    out_ref[...] = x + m2


def block_forward(x, w_slab, vec_slab):
    Bx, Tx, Cx = x.shape
    # wrapper-side flatten: one kernel invocation over the (B*T, C) residual slab;
    # reshape back outside the kernel (no in-kernel relayout).
    x2d = x.reshape(Bx * Tx, Cx)

    vmem = pl.BlockSpec(memory_space=pltpu.MemorySpace.VMEM)
    out2d = pl.pallas_call(
        block_kernel,
        out_shape=jax.ShapeDtypeStruct((Bx * Tx, Cx), jnp.float32),
        in_specs=[vmem, vmem, vmem],          # 3 input DMAs total (x, weights, vectors)
        out_specs=vmem,
    )(x2d, w_slab, vec_slab)
    return out2d.reshape(Bx, Tx, Cx)


def init_params(key):
    """Deterministic synthetic parameters (shapes of Block.__init__), packed into
    one bf16 weight slab + one f32 vector slab (2 parameter DMAs per call)."""
    ks = jax.random.split(key, 6)
    std = 0.02

    def lin(k, fan_in, fan_out):
        # stored as (in, out) so the kernel computes x @ W + b  (== PyTorch x @ W.T + b)
        w = std * jax.random.normal(k, (fan_in, fan_out), dtype=jnp.float32)
        b = jnp.zeros((fan_out,), dtype=jnp.float32)
        return w, b

    ln1_g = jnp.ones((C,), jnp.float32)
    ln1_b = jnp.zeros((C,), jnp.float32)
    ln2_g = jnp.ones((C,), jnp.float32)
    ln2_b = jnp.zeros((C,), jnp.float32)

    wq, bq = lin(ks[0], C, C)
    wk, bk = lin(ks[1], C, C)
    wv, bv = lin(ks[2], C, C)
    wqkv = jnp.concatenate([wq, wk, wv], axis=1)    # (C, 3C)
    bqkv = jnp.concatenate([bq, bk, bv], axis=0)    # (3C,)

    wp, bp = lin(ks[3], C, C)
    w1, b1 = lin(ks[4], C, 4 * C)
    w2, b2 = lin(ks[5], 4 * C, C)

    def pad_cols(w):
        return jnp.pad(w, ((0, 0), (0, LANES - w.shape[1])))

    # row order MUST match the kernel's static slab offsets: wqkv | w1 | w2 | wp
    w_slab = jnp.concatenate(
        [pad_cols(wqkv), pad_cols(w1), pad_cols(w2), pad_cols(wp)],
        axis=0).astype(jnp.bfloat16)                # (224, 128) bf16

    def pad_row(v):
        return jnp.pad(v, (0, LANES - v.shape[0]))[None, :]

    vec_slab = jnp.concatenate(
        [pad_row(ln1_g), pad_row(ln1_b), pad_row(bqkv), pad_row(bp),
         pad_row(ln2_g), pad_row(ln2_b), pad_row(b1), pad_row(b2)],
        axis=0).astype(jnp.float32)                 # (8, 128) f32

    # TODO(synk): dropout layers (attn_pdrop / resid_pdrop) are identity here (eval / p=0);
    # add pltpu.prng_* based masking if training-mode dropout is ever required.
    return w_slab, vec_slab


if __name__ == "__main__":
    key = jax.random.PRNGKey(0)
    k_x, k_p = jax.random.split(key)
    x = jax.random.normal(k_x, (B, T, C), dtype=jnp.float32)
    w_slab, vec_slab = init_params(k_p)

    fwd = jax.jit(block_forward)
    out = fwd(x, w_slab, vec_slab)
    out = jax.block_until_ready(out)
    assert out.shape == (B, T, C) and out.dtype == jnp.float32
    assert bool(jnp.all(jnp.isfinite(out)))
    print("KERNEL_OK")
</pallas_src>

<mosaic_0001>
module attributes {stable_mosaic.version = 11 : i64} {
  func.func @block_kernel(%arg0: memref<16x32xf32, #tpu.memory_space<vmem>>, %arg1: memref<224x128xbf16, #tpu.memory_space<vmem>>, %arg2: memref<8x128xf32, #tpu.memory_space<vmem>>, %arg3: memref<16x32xf32, #tpu.memory_space<vmem>>) attributes {dimension_semantics = [], scalar_prefetch = 0 : i64, scratch_operands = 0 : i64, tpu.core_type = #tpu.core_type<tc>} {
    %c0 = arith.constant 0 : index
    %c0_0 = arith.constant 0 : index
    %0 = vector.load %arg0[%c0, %c0_0] : memref<16x32xf32, #tpu.memory_space<vmem>>, vector<16x32xf32>
    %c0_1 = arith.constant 0 : index
    %c0_2 = arith.constant 0 : index
    %1 = vector.load %arg2[%c0_1, %c0_2] : memref<8x128xf32, #tpu.memory_space<vmem>>, vector<1x32xf32>
    %c1 = arith.constant 1 : index
    %c0_3 = arith.constant 0 : index
    %2 = vector.load %arg2[%c1, %c0_3] : memref<8x128xf32, #tpu.memory_space<vmem>>, vector<1x32xf32>
    %c2 = arith.constant 2 : index
    %c0_4 = arith.constant 0 : index
    %3 = vector.load %arg2[%c2, %c0_4] : memref<8x128xf32, #tpu.memory_space<vmem>>, vector<1x96xf32>
    %c3 = arith.constant 3 : index
    %c0_5 = arith.constant 0 : index
    %4 = vector.load %arg2[%c3, %c0_5] : memref<8x128xf32, #tpu.memory_space<vmem>>, vector<1x32xf32>
    %c4 = arith.constant 4 : index
    %c0_6 = arith.constant 0 : index
    %5 = vector.load %arg2[%c4, %c0_6] : memref<8x128xf32, #tpu.memory_space<vmem>>, vector<1x32xf32>
    %c5 = arith.constant 5 : index
    %c0_7 = arith.constant 0 : index
    %6 = vector.load %arg2[%c5, %c0_7] : memref<8x128xf32, #tpu.memory_space<vmem>>, vector<1x32xf32>
    %c6 = arith.constant 6 : index
    %c0_8 = arith.constant 0 : index
    %7 = vector.load %arg2[%c6, %c0_8] : memref<8x128xf32, #tpu.memory_space<vmem>>, vector<1x128xf32>
    %c7 = arith.constant 7 : index
    %c0_9 = arith.constant 0 : index
    %8 = vector.load %arg2[%c7, %c0_9] : memref<8x128xf32, #tpu.memory_space<vmem>>, vector<1x32xf32>
    %c0_10 = arith.constant 0 : index
    %c0_11 = arith.constant 0 : index
    %9 = vector.load %arg1[%c0_10, %c0_11] : memref<224x128xbf16, #tpu.memory_space<vmem>>, vector<32x96xbf16>
    %c32 = arith.constant 32 : index
    %c0_12 = arith.constant 0 : index
    %10 = vector.load %arg1[%c32, %c0_12] : memref<224x128xbf16, #tpu.memory_space<vmem>>, vector<32x128xbf16>
    %c64 = arith.constant 64 : index
    %c0_13 = arith.constant 0 : index
    %11 = vector.load %arg1[%c64, %c0_13] : memref<224x128xbf16, #tpu.memory_space<vmem>>, vector<128x32xbf16>
    %c192 = arith.constant 192 : index
    %c0_14 = arith.constant 0 : index
    %12 = vector.load %arg1[%c192, %c0_14] : memref<224x128xbf16, #tpu.memory_space<vmem>>, vector<32x32xbf16>
    %cst = arith.constant dense<0.000000e+00> : vector<16xf32>
    %13 = vector.multi_reduction <add>, %0, %cst [1] : vector<16x32xf32> to vector<16xf32>
    %14 = vector.shape_cast %13 : vector<16xf32> to vector<16x1xf32>
    %cst_15 = arith.constant 3.200000e+01 : f32
    %15 = vector.broadcast %cst_15 : f32 to vector<16x1xf32>
    %16 = arith.divf %14, %15 : vector<16x1xf32>
    %17 = vector.broadcast %16 : vector<16x1xf32> to vector<16x32xf32>
    %18 = arith.subf %0, %17 : vector<16x32xf32>
    %19 = arith.mulf %18, %18 : vector<16x32xf32>
    %cst_16 = arith.constant dense<0.000000e+00> : vector<16xf32>
    %20 = vector.multi_reduction <add>, %19, %cst_16 [1] : vector<16x32xf32> to vector<16xf32>
    %21 = vector.shape_cast %20 : vector<16xf32> to vector<16x1xf32>
    %cst_17 = arith.constant 3.200000e+01 : f32
    %22 = vector.broadcast %cst_17 : f32 to vector<16x1xf32>
    %23 = arith.divf %21, %22 : vector<16x1xf32>
    %24 = vector.broadcast %16 : vector<16x1xf32> to vector<16x32xf32>
    %25 = arith.subf %0, %24 : vector<16x32xf32>
    %cst_18 = arith.constant 9.99999974E-6 : f32
    %26 = vector.broadcast %cst_18 : f32 to vector<16x1xf32>
    %27 = arith.addf %23, %26 : vector<16x1xf32>
    %28 = math.rsqrt %27 : vector<16x1xf32>
    %29 = vector.broadcast %28 : vector<16x1xf32> to vector<16x32xf32>
    %30 = arith.mulf %25, %29 : vector<16x32xf32>
    %31 = vector.broadcast %1 : vector<1x32xf32> to vector<16x32xf32>
    %32 = arith.mulf %30, %31 : vector<16x32xf32>
    %33 = vector.broadcast %2 : vector<1x32xf32> to vector<16x32xf32>
    %34 = arith.addf %32, %33 : vector<16x32xf32>
    %35 = arith.truncf %34 : vector<16x32xf32> to vector<16x32xbf16>
    %cst_19 = arith.constant dense<0.000000e+00> : vector<16x96xf32>
    %36 = tpu.matmul %35, %9, %cst_19 {dimension_numbers = #tpu.dot_dimension_numbers<[1], [0], [0], [1], [0, 0, 1, 1], [], []>} : vector<16x32xbf16>, vector<32x96xbf16>, vector<16x96xf32> -> vector<16x96xf32>
    %37 = vector.broadcast %3 : vector<1x96xf32> to vector<16x96xf32>
    %38 = arith.addf %36, %37 : vector<16x96xf32>
    %39 = vector.extract_strided_slice %38 {offsets = [0, 0], sizes = [16, 32], strides = [1, 1]} : vector<16x96xf32> to vector<16x32xf32>
    %40 = vector.extract_strided_slice %38 {offsets = [0, 32], sizes = [16, 32], strides = [1, 1]} : vector<16x96xf32> to vector<16x32xf32>
    %41 = vector.extract_strided_slice %38 {offsets = [0, 64], sizes = [16, 32], strides = [1, 1]} : vector<16x96xf32> to vector<16x32xf32>
    %42 = tpu.iota {dimensions = array<i32: 0>} : vector<8x8xi32>
    %43 = tpu.iota {dimensions = array<i32: 1>} : vector<8x8xi32>
    %44 = arith.cmpi sge, %42, %43 : vector<8x8xi32>
    %cst_20 = arith.constant 0.000000e+00 : f32
    %cst_21 = arith.constant 0xFF800000 : f32
    %45 = vector.broadcast %cst_20 : f32 to vector<8x8xf32>
    %46 = vector.broadcast %cst_21 : f32 to vector<8x8xf32>
    %47 = arith.select %44, %45, %46 : vector<8x8xi1>, vector<8x8xf32>
    %48 = vector.extract_strided_slice %39 {offsets = [0, 0], sizes = [8, 8], strides = [1, 1]} : vector<16x32xf32> to vector<8x8xf32>
    %49 = arith.truncf %48 : vector<8x8xf32> to vector<8x8xbf16>
    %50 = vector.extract_strided_slice %40 {offsets = [0, 0], sizes = [8, 8], strides = [1, 1]} : vector<16x32xf32> to vector<8x8xf32>
    %51 = arith.truncf %50 : vector<8x8xf32> to vector<8x8xbf16>
    %52 = vector.extract_strided_slice %41 {offsets = [0, 0], sizes = [8, 8], strides = [1, 1]} : vector<16x32xf32> to vector<8x8xf32>
    %53 = arith.truncf %52 : vector<8x8xf32> to vector<8x8xbf16>
    %cst_22 = arith.constant dense<0.000000e+00> : vector<8x8xf32>
    %54 = tpu.matmul %49, %51, %cst_22 {dimension_numbers = #tpu.dot_dimension_numbers<[1], [1], [0], [0], [0, 0, 1, 0], [], []>} : vector<8x8xbf16>, vector<8x8xbf16>, vector<8x8xf32> -> vector<8x8xf32>
    %cst_23 = arith.constant 0.353553385 : f32
    %55 = vector.broadcast %cst_23 : f32 to vector<8x8xf32>
    %56 = arith.mulf %54, %55 : vector<8x8xf32>
    %57 = arith.addf %56, %47 : vector<8x8xf32>
    %cst_24 = arith.constant dense<0xFF800000> : vector<8xf32>
    %58 = vector.multi_reduction <maximumf>, %57, %cst_24 [1] : vector<8x8xf32> to vector<8xf32>
    %59 = vector.shape_cast %58 : vector<8xf32> to vector<8x1xf32>
    %60 = vector.broadcast %59 : vector<8x1xf32> to vector<8x8xf32>
    %61 = arith.subf %57, %60 : vector<8x8xf32>
    %62 = math.exp %61 : vector<8x8xf32>
    %cst_25 = arith.constant dense<0.000000e+00> : vector<8xf32>
    %63 = vector.multi_reduction <add>, %62, %cst_25 [1] : vector<8x8xf32> to vector<8xf32>
    %64 = vector.shape_cast %63 : vector<8xf32> to vector<8x1xf32>
    %65 = tpu.reciprocal %64 {approx = true} : vector<8x1xf32> -> vector<8x1xf32>
    %66 = vector.broadcast %65 : vector<8x1xf32> to vector<8x8xf32>
    %67 = arith.mulf %62, %66 : vector<8x8xf32>
    %68 = arith.truncf %67 : vector<8x8xf32> to vector<8x8xbf16>
    %cst_26 = arith.constant dense<0.000000e+00> : vector<8x8xf32>
    %69 = tpu.matmul %68, %53, %cst_26 {dimension_numbers = #tpu.dot_dimension_numbers<[1], [0], [0], [1], [0, 0, 1, 1], [], []>} : vector<8x8xbf16>, vector<8x8xbf16>, vector<8x8xf32> -> vector<8x8xf32>
    %70 = vector.extract_strided_slice %39 {offsets = [0, 8], sizes = [8, 8], strides = [1, 1]} : vector<16x32xf32> to vector<8x8xf32>
    %71 = arith.truncf %70 : vector<8x8xf32> to vector<8x8xbf16>
    %72 = vector.extract_strided_slice %40 {offsets = [0, 8], sizes = [8, 8], strides = [1, 1]} : vector<16x32xf32> to vector<8x8xf32>
    %73 = arith.truncf %72 : vector<8x8xf32> to vector<8x8xbf16>
    %74 = vector.extract_strided_slice %41 {offsets = [0, 8], sizes = [8, 8], strides = [1, 1]} : vector<16x32xf32> to vector<8x8xf32>
    %75 = arith.truncf %74 : vector<8x8xf32> to vector<8x8xbf16>
    %cst_27 = arith.constant dense<0.000000e+00> : vector<8x8xf32>
    %76 = tpu.matmul %71, %73, %cst_27 {dimension_numbers = #tpu.dot_dimension_numbers<[1], [1], [0], [0], [0, 0, 1, 0], [], []>} : vector<8x8xbf16>, vector<8x8xbf16>, vector<8x8xf32> -> vector<8x8xf32>
    %cst_28 = arith.constant 0.353553385 : f32
    %77 = vector.broadcast %cst_28 : f32 to vector<8x8xf32>
    %78 = arith.mulf %76, %77 : vector<8x8xf32>
    %79 = arith.addf %78, %47 : vector<8x8xf32>
    %cst_29 = arith.constant dense<0xFF800000> : vector<8xf32>
    %80 = vector.multi_reduction <maximumf>, %79, %cst_29 [1] : vector<8x8xf32> to vector<8xf32>
    %81 = vector.shape_cast %80 : vector<8xf32> to vector<8x1xf32>
    %82 = vector.broadcast %81 : vector<8x1xf32> to vector<8x8xf32>
    %83 = arith.subf %79, %82 : vector<8x8xf32>
    %84 = math.exp %83 : vector<8x8xf32>
    %cst_30 = arith.constant dense<0.000000e+00> : vector<8xf32>
    %85 = vector.multi_reduction <add>, %84, %cst_30 [1] : vector<8x8xf32> to vector<8xf32>
    %86 = vector.shape_cast %85 : vector<8xf32> to vector<8x1xf32>
    %87 = tpu.reciprocal %86 {approx = true} : vector<8x1xf32> -> vector<8x1xf32>
    %88 = vector.broadcast %87 : vector<8x1xf32> to vector<8x8xf32>
    %89 = arith.mulf %84, %88 : vector<8x8xf32>
    %90 = arith.truncf %89 : vector<8x8xf32> to vector<8x8xbf16>
    %cst_31 = arith.constant dense<0.000000e+00> : vector<8x8xf32>
    %91 = tpu.matmul %90, %75, %cst_31 {dimension_numbers = #tpu.dot_dimension_numbers<[1], [0], [0], [1], [0, 0, 1, 1], [], []>} : vector<8x8xbf16>, vector<8x8xbf16>, vector<8x8xf32> -> vector<8x8xf32>
    %92 = vector.extract_strided_slice %39 {offsets = [0, 16], sizes = [8, 8], strides = [1, 1]} : vector<16x32xf32> to vector<8x8xf32>
    %93 = arith.truncf %92 : vector<8x8xf32> to vector<8x8xbf16>
    %94 = vector.extract_strided_slice %40 {offsets = [0, 16], sizes = [8, 8], strides = [1, 1]} : vector<16x32xf32> to vector<8x8xf32>
    %95 = arith.truncf %94 : vector<8x8xf32> to vector<8x8xbf16>
    %96 = vector.extract_strided_slice %41 {offsets = [0, 16], sizes = [8, 8], strides = [1, 1]} : vector<16x32xf32> to vector<8x8xf32>
    %97 = arith.truncf %96 : vector<8x8xf32> to vector<8x8xbf16>
    %cst_32 = arith.constant dense<0.000000e+00> : vector<8x8xf32>
    %98 = tpu.matmul %93, %95, %cst_32 {dimension_numbers = #tpu.dot_dimension_numbers<[1], [1], [0], [0], [0, 0, 1, 0], [], []>} : vector<8x8xbf16>, vector<8x8xbf16>, vector<8x8xf32> -> vector<8x8xf32>
    %cst_33 = arith.constant 0.353553385 : f32
    %99 = vector.broadcast %cst_33 : f32 to vector<8x8xf32>
    %100 = arith.mulf %98, %99 : vector<8x8xf32>
    %101 = arith.addf %100, %47 : vector<8x8xf32>
    %cst_34 = arith.constant dense<0xFF800000> : vector<8xf32>
    %102 = vector.multi_reduction <maximumf>, %101, %cst_34 [1] : vector<8x8xf32> to vector<8xf32>
    %103 = vector.shape_cast %102 : vector<8xf32> to vector<8x1xf32>
    %104 = vector.broadcast %103 : vector<8x1xf32> to vector<8x8xf32>
    %105 = arith.subf %101, %104 : vector<8x8xf32>
    %106 = math.exp %105 : vector<8x8xf32>
    %cst_35 = arith.constant dense<0.000000e+00> : vector<8xf32>
    %107 = vector.multi_reduction <add>, %106, %cst_35 [1] : vector<8x8xf32> to vector<8xf32>
    %108 = vector.shape_cast %107 : vector<8xf32> to vector<8x1xf32>
    %109 = tpu.reciprocal %108 {approx = true} : vector<8x1xf32> -> vector<8x1xf32>
    %110 = vector.broadcast %109 : vector<8x1xf32> to vector<8x8xf32>
    %111 = arith.mulf %106, %110 : vector<8x8xf32>
    %112 = arith.truncf %111 : vector<8x8xf32> to vector<8x8xbf16>
    %cst_36 = arith.constant dense<0.000000e+00> : vector<8x8xf32>
    %113 = tpu.matmul %112, %97, %cst_36 {dimension_numbers = #tpu.dot_dimension_numbers<[1], [0], [0], [1], [0, 0, 1, 1], [], []>} : vector<8x8xbf16>, vector<8x8xbf16>, vector<8x8xf32> -> vector<8x8xf32>
    %114 = vector.extract_strided_slice %39 {offsets = [0, 24], sizes = [8, 8], strides = [1, 1]} : vector<16x32xf32> to vector<8x8xf32>
    %115 = arith.truncf %114 : vector<8x8xf32> to vector<8x8xbf16>
    %116 = vector.extract_strided_slice %40 {offsets = [0, 24], sizes = [8, 8], strides = [1, 1]} : vector<16x32xf32> to vector<8x8xf32>
    %117 = arith.truncf %116 : vector<8x8xf32> to vector<8x8xbf16>
    %118 = vector.extract_strided_slice %41 {offsets = [0, 24], sizes = [8, 8], strides = [1, 1]} : vector<16x32xf32> to vector<8x8xf32>
    %119 = arith.truncf %118 : vector<8x8xf32> to vector<8x8xbf16>
    %cst_37 = arith.constant dense<0.000000e+00> : vector<8x8xf32>
    %120 = tpu.matmul %115, %117, %cst_37 {dimension_numbers = #tpu.dot_dimension_numbers<[1], [1], [0], [0], [0, 0, 1, 0], [], []>} : vector<8x8xbf16>, vector<8x8xbf16>, vector<8x8xf32> -> vector<8x8xf32>
    %cst_38 = arith.constant 0.353553385 : f32
    %121 = vector.broadcast %cst_38 : f32 to vector<8x8xf32>
    %122 = arith.mulf %120, %121 : vector<8x8xf32>
    %123 = arith.addf %122, %47 : vector<8x8xf32>
    %cst_39 = arith.constant dense<0xFF800000> : vector<8xf32>
    %124 = vector.multi_reduction <maximumf>, %123, %cst_39 [1] : vector<8x8xf32> to vector<8xf32>
    %125 = vector.shape_cast %124 : vector<8xf32> to vector<8x1xf32>
    %126 = vector.broadcast %125 : vector<8x1xf32> to vector<8x8xf32>
    %127 = arith.subf %123, %126 : vector<8x8xf32>
    %128 = math.exp %127 : vector<8x8xf32>
    %cst_40 = arith.constant dense<0.000000e+00> : vector<8xf32>
    %129 = vector.multi_reduction <add>, %128, %cst_40 [1] : vector<8x8xf32> to vector<8xf32>
    %130 = vector.shape_cast %129 : vector<8xf32> to vector<8x1xf32>
    %131 = tpu.reciprocal %130 {approx = true} : vector<8x1xf32> -> vector<8x1xf32>
    %132 = vector.broadcast %131 : vector<8x1xf32> to vector<8x8xf32>
    %133 = arith.mulf %128, %132 : vector<8x8xf32>
    %134 = arith.truncf %133 : vector<8x8xf32> to vector<8x8xbf16>
    %cst_41 = arith.constant dense<0.000000e+00> : vector<8x8xf32>
    %135 = tpu.matmul %134, %119, %cst_41 {dimension_numbers = #tpu.dot_dimension_numbers<[1], [0], [0], [1], [0, 0, 1, 1], [], []>} : vector<8x8xbf16>, vector<8x8xbf16>, vector<8x8xf32> -> vector<8x8xf32>
    %136 = tpu.concatenate %69, %91, %113, %135 in 1 : vector<8x8xf32>, vector<8x8xf32>, vector<8x8xf32>, vector<8x8xf32> -> vector<8x32xf32>
    %137 = vector.extract_strided_slice %39 {offsets = [8, 0], sizes = [8, 8], strides = [1, 1]} : vector<16x32xf32> to vector<8x8xf32>
    %138 = arith.truncf %137 : vector<8x8xf32> to vector<8x8xbf16>
    %139 = vector.extract_strided_slice %40 {offsets = [8, 0], sizes = [8, 8], strides = [1, 1]} : vector<16x32xf32> to vector<8x8xf32>
    %140 = arith.truncf %139 : vector<8x8xf32> to vector<8x8xbf16>
    %141 = vector.extract_strided_slice %41 {offsets = [8, 0], sizes = [8, 8], strides = [1, 1]} : vector<16x32xf32> to vector<8x8xf32>
    %142 = arith.truncf %141 : vector<8x8xf32> to vector<8x8xbf16>
    %cst_42 = arith.constant dense<0.000000e+00> : vector<8x8xf32>
    %143 = tpu.matmul %138, %140, %cst_42 {dimension_numbers = #tpu.dot_dimension_numbers<[1], [1], [0], [0], [0, 0, 1, 0], [], []>} : vector<8x8xbf16>, vector<8x8xbf16>, vector<8x8xf32> -> vector<8x8xf32>
    %cst_43 = arith.constant 0.353553385 : f32
    %144 = vector.broadcast %cst_43 : f32 to vector<8x8xf32>
    %145 = arith.mulf %143, %144 : vector<8x8xf32>
    %146 = arith.addf %145, %47 : vector<8x8xf32>
    %cst_44 = arith.constant dense<0xFF800000> : vector<8xf32>
    %147 = vector.multi_reduction <maximumf>, %146, %cst_44 [1] : vector<8x8xf32> to vector<8xf32>
    %148 = vector.shape_cast %147 : vector<8xf32> to vector<8x1xf32>
    %149 = vector.broadcast %148 : vector<8x1xf32> to vector<8x8xf32>
    %150 = arith.subf %146, %149 : vector<8x8xf32>
    %151 = math.exp %150 : vector<8x8xf32>
    %cst_45 = arith.constant dense<0.000000e+00> : vector<8xf32>
    %152 = vector.multi_reduction <add>, %151, %cst_45 [1] : vector<8x8xf32> to vector<8xf32>
    %153 = vector.shape_cast %152 : vector<8xf32> to vector<8x1xf32>
    %154 = tpu.reciprocal %153 {approx = true} : vector<8x1xf32> -> vector<8x1xf32>
    %155 = vector.broadcast %154 : vector<8x1xf32> to vector<8x8xf32>
    %156 = arith.mulf %151, %155 : vector<8x8xf32>
    %157 = arith.truncf %156 : vector<8x8xf32> to vector<8x8xbf16>
    %cst_46 = arith.constant dense<0.000000e+00> : vector<8x8xf32>
    %158 = tpu.matmul %157, %142, %cst_46 {dimension_numbers = #tpu.dot_dimension_numbers<[1], [0], [0], [1], [0, 0, 1, 1], [], []>} : vector<8x8xbf16>, vector<8x8xbf16>, vector<8x8xf32> -> vector<8x8xf32>
    %159 = vector.extract_strided_slice %39 {offsets = [8, 8], sizes = [8, 8], strides = [1, 1]} : vector<16x32xf32> to vector<8x8xf32>
    %160 = arith.truncf %159 : vector<8x8xf32> to vector<8x8xbf16>
    %161 = vector.extract_strided_slice %40 {offsets = [8, 8], sizes = [8, 8], strides = [1, 1]} : vector<16x32xf32> to vector<8x8xf32>
    %162 = arith.truncf %161 : vector<8x8xf32> to vector<8x8xbf16>
    %163 = vector.extract_strided_slice %41 {offsets = [8, 8], sizes = [8, 8], strides = [1, 1]} : vector<16x32xf32> to vector<8x8xf32>
    %164 = arith.truncf %163 : vector<8x8xf32> to vector<8x8xbf16>
    %cst_47 = arith.constant dense<0.000000e+00> : vector<8x8xf32>
    %165 = tpu.matmul %160, %162, %cst_47 {dimension_numbers = #tpu.dot_dimension_numbers<[1], [1], [0], [0], [0, 0, 1, 0], [], []>} : vector<8x8xbf16>, vector<8x8xbf16>, vector<8x8xf32> -> vector<8x8xf32>
    %cst_48 = arith.constant 0.353553385 : f32
    %166 = vector.broadcast %cst_48 : f32 to vector<8x8xf32>
    %167 = arith.mulf %165, %166 : vector<8x8xf32>
    %168 = arith.addf %167, %47 : vector<8x8xf32>
    %cst_49 = arith.constant dense<0xFF800000> : vector<8xf32>
    %169 = vector.multi_reduction <maximumf>, %168, %cst_49 [1] : vector<8x8xf32> to vector<8xf32>
    %170 = vector.shape_cast %169 : vector<8xf32> to vector<8x1xf32>
    %171 = vector.broadcast %170 : vector<8x1xf32> to vector<8x8xf32>
    %172 = arith.subf %168, %171 : vector<8x8xf32>
    %173 = math.exp %172 : vector<8x8xf32>
    %cst_50 = arith.constant dense<0.000000e+00> : vector<8xf32>
    %174 = vector.multi_reduction <add>, %173, %cst_50 [1] : vector<8x8xf32> to vector<8xf32>
    %175 = vector.shape_cast %174 : vector<8xf32> to vector<8x1xf32>
    %176 = tpu.reciprocal %175 {approx = true} : vector<8x1xf32> -> vector<8x1xf32>
    %177 = vector.broadcast %176 : vector<8x1xf32> to vector<8x8xf32>
    %178 = arith.mulf %173, %177 : vector<8x8xf32>
    %179 = arith.truncf %178 : vector<8x8xf32> to vector<8x8xbf16>
    %cst_51 = arith.constant dense<0.000000e+00> : vector<8x8xf32>
    %180 = tpu.matmul %179, %164, %cst_51 {dimension_numbers = #tpu.dot_dimension_numbers<[1], [0], [0], [1], [0, 0, 1, 1], [], []>} : vector<8x8xbf16>, vector<8x8xbf16>, vector<8x8xf32> -> vector<8x8xf32>
    %181 = vector.extract_strided_slice %39 {offsets = [8, 16], sizes = [8, 8], strides = [1, 1]} : vector<16x32xf32> to vector<8x8xf32>
    %182 = arith.truncf %181 : vector<8x8xf32> to vector<8x8xbf16>
    %183 = vector.extract_strided_slice %40 {offsets = [8, 16], sizes = [8, 8], strides = [1, 1]} : vector<16x32xf32> to vector<8x8xf32>
    %184 = arith.truncf %183 : vector<8x8xf32> to vector<8x8xbf16>
    %185 = vector.extract_strided_slice %41 {offsets = [8, 16], sizes = [8, 8], strides = [1, 1]} : vector<16x32xf32> to vector<8x8xf32>
    %186 = arith.truncf %185 : vector<8x8xf32> to vector<8x8xbf16>
    %cst_52 = arith.constant dense<0.000000e+00> : vector<8x8xf32>
    %187 = tpu.matmul %182, %184, %cst_52 {dimension_numbers = #tpu.dot_dimension_numbers<[1], [1], [0], [0], [0, 0, 1, 0], [], []>} : vector<8x8xbf16>, vector<8x8xbf16>, vector<8x8xf32> -> vector<8x8xf32>
    %cst_53 = arith.constant 0.353553385 : f32
    %188 = vector.broadcast %cst_53 : f32 to vector<8x8xf32>
    %189 = arith.mulf %187, %188 : vector<8x8xf32>
    %190 = arith.addf %189, %47 : vector<8x8xf32>
    %cst_54 = arith.constant dense<0xFF800000> : vector<8xf32>
    %191 = vector.multi_reduction <maximumf>, %190, %cst_54 [1] : vector<8x8xf32> to vector<8xf32>
    %192 = vector.shape_cast %191 : vector<8xf32> to vector<8x1xf32>
    %193 = vector.broadcast %192 : vector<8x1xf32> to vector<8x8xf32>
    %194 = arith.subf %190, %193 : vector<8x8xf32>
    %195 = math.exp %194 : vector<8x8xf32>
    %cst_55 = arith.constant dense<0.000000e+00> : vector<8xf32>
    %196 = vector.multi_reduction <add>, %195, %cst_55 [1] : vector<8x8xf32> to vector<8xf32>
    %197 = vector.shape_cast %196 : vector<8xf32> to vector<8x1xf32>
    %198 = tpu.reciprocal %197 {approx = true} : vector<8x1xf32> -> vector<8x1xf32>
    %199 = vector.broadcast %198 : vector<8x1xf32> to vector<8x8xf32>
    %200 = arith.mulf %195, %199 : vector<8x8xf32>
    %201 = arith.truncf %200 : vector<8x8xf32> to vector<8x8xbf16>
    %cst_56 = arith.constant dense<0.000000e+00> : vector<8x8xf32>
    %202 = tpu.matmul %201, %186, %cst_56 {dimension_numbers = #tpu.dot_dimension_numbers<[1], [0], [0], [1], [0, 0, 1, 1], [], []>} : vector<8x8xbf16>, vector<8x8xbf16>, vector<8x8xf32> -> vector<8x8xf32>
    %203 = vector.extract_strided_slice %39 {offsets = [8, 24], sizes = [8, 8], strides = [1, 1]} : vector<16x32xf32> to vector<8x8xf32>
    %204 = arith.truncf %203 : vector<8x8xf32> to vector<8x8xbf16>
    %205 = vector.extract_strided_slice %40 {offsets = [8, 24], sizes = [8, 8], strides = [1, 1]} : vector<16x32xf32> to vector<8x8xf32>
    %206 = arith.truncf %205 : vector<8x8xf32> to vector<8x8xbf16>
    %207 = vector.extract_strided_slice %41 {offsets = [8, 24], sizes = [8, 8], strides = [1, 1]} : vector<16x32xf32> to vector<8x8xf32>
    %208 = arith.truncf %207 : vector<8x8xf32> to vector<8x8xbf16>
    %cst_57 = arith.constant dense<0.000000e+00> : vector<8x8xf32>
    %209 = tpu.matmul %204, %206, %cst_57 {dimension_numbers = #tpu.dot_dimension_numbers<[1], [1], [0], [0], [0, 0, 1, 0], [], []>} : vector<8x8xbf16>, vector<8x8xbf16>, vector<8x8xf32> -> vector<8x8xf32>
    %cst_58 = arith.constant 0.353553385 : f32
    %210 = vector.broadcast %cst_58 : f32 to vector<8x8xf32>
    %211 = arith.mulf %209, %210 : vector<8x8xf32>
    %212 = arith.addf %211, %47 : vector<8x8xf32>
    %cst_59 = arith.constant dense<0xFF800000> : vector<8xf32>
    %213 = vector.multi_reduction <maximumf>, %212, %cst_59 [1] : vector<8x8xf32> to vector<8xf32>
    %214 = vector.shape_cast %213 : vector<8xf32> to vector<8x1xf32>
    %215 = vector.broadcast %214 : vector<8x1xf32> to vector<8x8xf32>
    %216 = arith.subf %212, %215 : vector<8x8xf32>
    %217 = math.exp %216 : vector<8x8xf32>
    %cst_60 = arith.constant dense<0.000000e+00> : vector<8xf32>
    %218 = vector.multi_reduction <add>, %217, %cst_60 [1] : vector<8x8xf32> to vector<8xf32>
    %219 = vector.shape_cast %218 : vector<8xf32> to vector<8x1xf32>
    %220 = tpu.reciprocal %219 {approx = true} : vector<8x1xf32> -> vector<8x1xf32>
    %221 = vector.broadcast %220 : vector<8x1xf32> to vector<8x8xf32>
    %222 = arith.mulf %217, %221 : vector<8x8xf32>
    %223 = arith.truncf %222 : vector<8x8xf32> to vector<8x8xbf16>
    %cst_61 = arith.constant dense<0.000000e+00> : vector<8x8xf32>
    %224 = tpu.matmul %223, %208, %cst_61 {dimension_numbers = #tpu.dot_dimension_numbers<[1], [0], [0], [1], [0, 0, 1, 1], [], []>} : vector<8x8xbf16>, vector<8x8xbf16>, vector<8x8xf32> -> vector<8x8xf32>
    %225 = tpu.concatenate %158, %180, %202, %224 in 1 : vector<8x8xf32>, vector<8x8xf32>, vector<8x8xf32>, vector<8x8xf32> -> vector<8x32xf32>
    %226 = tpu.concatenate %136, %225 in 0 : vector<8x32xf32>, vector<8x32xf32> -> vector<16x32xf32>
    %227 = arith.truncf %226 : vector<16x32xf32> to vector<16x32xbf16>
    %cst_62 = arith.constant dense<0.000000e+00> : vector<16x32xf32>
    %228 = tpu.matmul %227, %12, %cst_62 {dimension_numbers = #tpu.dot_dimension_numbers<[1], [0], [0], [1], [0, 0, 1, 1], [], []>} : vector<16x32xbf16>, vector<32x32xbf16>, vector<16x32xf32> -> vector<16x32xf32>
    %229 = vector.broadcast %4 : vector<1x32xf32> to vector<16x32xf32>
    %230 = arith.addf %228, %229 : vector<16x32xf32>
    %231 = arith.addf %0, %230 : vector<16x32xf32>
    %cst_63 = arith.constant dense<0.000000e+00> : vector<16xf32>
    %232 = vector.multi_reduction <add>, %231, %cst_63 [1] : vector<16x32xf32> to vector<16xf32>
    %233 = vector.shape_cast %232 : vector<16xf32> to vector<16x1xf32>
    %cst_64 = arith.constant 3.200000e+01 : f32
    %234 = vector.broadcast %cst_64 : f32 to vector<16x1xf32>
    %235 = arith.divf %233, %234 : vector<16x1xf32>
    %236 = vector.broadcast %235 : vector<16x1xf32> to vector<16x32xf32>
    %237 = arith.subf %231, %236 : vector<16x32xf32>
    %238 = arith.mulf %237, %237 : vector<16x32xf32>
    %cst_65 = arith.constant dense<0.000000e+00> : vector<16xf32>
    %239 = vector.multi_reduction <add>, %238, %cst_65 [1] : vector<16x32xf32> to vector<16xf32>
    %240 = vector.shape_cast %239 : vector<16xf32> to vector<16x1xf32>
    %cst_66 = arith.constant 3.200000e+01 : f32
    %241 = vector.broadcast %cst_66 : f32 to vector<16x1xf32>
    %242 = arith.divf %240, %241 : vector<16x1xf32>
    %243 = vector.broadcast %235 : vector<16x1xf32> to vector<16x32xf32>
    %244 = arith.subf %231, %243 : vector<16x32xf32>
    %cst_67 = arith.constant 9.99999974E-6 : f32
    %245 = vector.broadcast %cst_67 : f32 to vector<16x1xf32>
    %246 = arith.addf %242, %245 : vector<16x1xf32>
    %247 = math.rsqrt %246 : vector<16x1xf32>
    %248 = vector.broadcast %247 : vector<16x1xf32> to vector<16x32xf32>
    %249 = arith.mulf %244, %248 : vector<16x32xf32>
    %250 = vector.broadcast %5 : vector<1x32xf32> to vector<16x32xf32>
    %251 = arith.mulf %249, %250 : vector<16x32xf32>
    %252 = vector.broadcast %6 : vector<1x32xf32> to vector<16x32xf32>
    %253 = arith.addf %251, %252 : vector<16x32xf32>
    %254 = arith.truncf %253 : vector<16x32xf32> to vector<16x32xbf16>
    %cst_68 = arith.constant dense<0.000000e+00> : vector<16x128xf32>
    %255 = tpu.matmul %254, %10, %cst_68 {dimension_numbers = #tpu.dot_dimension_numbers<[1], [0], [0], [1], [0, 0, 1, 1], [], []>} : vector<16x32xbf16>, vector<32x128xbf16>, vector<16x128xf32> -> vector<16x128xf32>
    %256 = vector.broadcast %7 : vector<1x128xf32> to vector<16x128xf32>
    %257 = arith.addf %255, %256 : vector<16x128xf32>
    %cst_69 = arith.constant 5.000000e-01 : f32
    %258 = vector.broadcast %cst_69 : f32 to vector<16x128xf32>
    %259 = arith.mulf %258, %257 : vector<16x128xf32>
    %cst_70 = arith.constant 0.707106769 : f32
    %260 = vector.broadcast %cst_70 : f32 to vector<16x128xf32>
    %261 = arith.mulf %257, %260 : vector<16x128xf32>
    %262 = math.erf %261 : vector<16x128xf32>
    %cst_71 = arith.constant 1.000000e+00 : f32
    %263 = vector.broadcast %cst_71 : f32 to vector<16x128xf32>
    %264 = arith.addf %263, %262 : vector<16x128xf32>
    %265 = arith.mulf %259, %264 : vector<16x128xf32>
    %266 = arith.truncf %265 : vector<16x128xf32> to vector<16x128xbf16>
    %cst_72 = arith.constant dense<0.000000e+00> : vector<16x32xf32>
    %267 = tpu.matmul %266, %11, %cst_72 {dimension_numbers = #tpu.dot_dimension_numbers<[1], [0], [0], [1], [0, 0, 1, 1], [], []>} : vector<16x128xbf16>, vector<128x32xbf16>, vector<16x32xf32> -> vector<16x32xf32>
    %268 = vector.broadcast %8 : vector<1x32xf32> to vector<16x32xf32>
    %269 = arith.addf %267, %268 : vector<16x32xf32>
    %270 = arith.addf %231, %269 : vector<16x32xf32>
    %c0_73 = arith.constant 0 : index
    %c0_74 = arith.constant 0 : index
    %271 = vector.load %arg3[%c0_73, %c0_74] : memref<16x32xf32, #tpu.memory_space<vmem>>, vector<16x32xf32>
    tpu.vector_store %arg3[%c0_73, %c0_74], %270 {strides = array<i32>} : memref<16x32xf32, #tpu.memory_space<vmem>>, vector<16x32xf32>,
    return
  }
}

</mosaic_0001>

<llo_original>
// kernel: block_forward.1
$region0: #{block_forward.1}
  #allocation0 [shape = 'u32[]', space=smem, size = 0x4, offset = 0x4, fixed_abs, tag = 'smem constant byte address 0x4 - core index']
  #allocation1 [shape = 'u32[144,128]{1,0:T(1,128)}', space=vmem, size = 0x12000, scoped, tag = 'internal scratch']
  %s0 = inlined_call_operand.hbm [shape: f32[16,32], index: 0, kind: input, shape index: {}]
  %s1 = inlined_call_operand.hbm [shape: bf16[224,128], index: 1, kind: input, shape index: {}]
  %s2 = inlined_call_operand.vmem [shape: f32[8,128], index: 2, kind: input, shape index: {}]
  %s3 = inlined_call_operand.hbm [shape: f32[16,32], index: 3, kind: output, shape index: {}]
  %s4 = sld [smem:[#allocation0]]
  $region30: #{block_forward.1} parent=0
    _
  %s6 = ssub.s32 1, %s4
  %s7 = scalar_select 0, %s6, %s4
  $region1: #{block_forward.1} parent=0
    #allocation2 [shape = 'u8[8192]{0}', space=vmem, size = 0x2000, scoped, tag = 'input window, operand 0, single buffered']
    #allocation3 [shape = 's32[1]{0}', space=sflag, size = 0x4, scoped, tag = 'scoped memory for block_forward.1']
    #allocation4 [shape = 's32[1]{0}', space=sflag, size = 0x4, scoped, tag = 'scoped memory for block_forward.1']
    #allocation5 [shape = 'u8[57344]{0}', space=vmem, size = 0xe000, scoped, tag = 'input window, operand 1, single buffered']
    #allocation6 [shape = 's32[1]{0}', space=sflag, size = 0x4, scoped, tag = 'scoped memory for block_forward.1']
    #allocation7 [shape = 'u8[8192]{0}', space=vmem, size = 0x2000, scoped, tag = 'output window, operand 0, single buffered']
    %8 = vsyncpa [#allocation3], 0
    %9 = vsyncpa [#allocation6], 0
    %10 = vsyncpa [#allocation4], 0
    // Predicated region
    $region2: #{block_forward.1} parent=1 // pred_check
      _
    $region3: #{block_forward.1} parent=1 // pred_check_branch
      %12 = sbr.rel (0) target = $region5
    $region4: #{block_forward.1} parent=1 // pred_region
      %s14 = ssub.s32 256, 256
      %15 = vsyncadd [#allocation3], %s14
      %s16 = sshll.u32 [#allocation2], 4
      %s17 = int_to_ptr.vmem [resolvable:$true] %s16
      %22 = dma.hbm_to_vmem [thread:$0]  %s0, 256, %s17, [#allocation3], 128, 128, 8
    $region5: #{block_forward.1} parent=1 // pred_fallthru
      _
    // Predicated region
    $region6: #{block_forward.1} parent=1 // pred_check
      _
    $region7: #{block_forward.1} parent=1 // pred_check_branch
      %24 = sbr.rel (0) target = $region9
    $region8: #{block_forward.1} parent=1 // pred_region
      %s26 = ssub.s32 1792, 1792
      %27 = vsyncadd [#allocation6], %s26
      %s28 = sshll.u32 [#allocation5], 4
      %s29 = int_to_ptr.vmem [resolvable:$true] %s28
      %34 = dma.hbm_to_vmem [thread:$0]  %s1, 1792, %s29, [#allocation6], 64, 64, 4
    $region9: #{block_forward.1} parent=1 // pred_fallthru
      _
    // Predicated region
    $region10: #{block_forward.1} parent=1 // pred_check
      _
    $region11: #{block_forward.1} parent=1 // pred_check_branch
      %36 = sbr.rel (0) target = $region13
    $region12: #{block_forward.1} parent=1 // pred_region
      _
    $region13: #{block_forward.1} parent=1 // pred_fallthru
      _
    // Predicated region
    $region14: #{block_forward.1} parent=1 // pred_check
      _
    $region15: #{block_forward.1} parent=1 // pred_check_branch
      %38 = sbr.rel (0) target = $region17
    $region16: #{block_forward.1} parent=1 // pred_region
      %39 = dma.done [#allocation3], 256
    $region17: #{block_forward.1} parent=1 // pred_fallthru
      _
    // Predicated region
    $region18: #{block_forward.1} parent=1 // pred_check
      _
    $region19: #{block_forward.1} parent=1 // pred_check_branch
      %41 = sbr.rel (0) target = $region21
    $region20: #{block_forward.1} parent=1 // pred_region
      %42 = dma.done [#allocation6], 1792
    $region21: #{block_forward.1} parent=1 // pred_fallthru
      _
    %v44 = vld [vmem:[#allocation2] sm:$0xff]
    %v45 = vld [vmem:[#allocation2 + $0x8] sm:$0xff]
    %v46 = vld [vmem:[%s2] sm:$0x1]
    %v47 = vld [vmem:[%s2 + $0x1] sm:$0x1]
    %v48 = vld [vmem:[%s2 + $0x2] sm:$0x1]
    %v49 = vld [vmem:[%s2 + $0x3] sm:$0x1]
    %v50 = vld [vmem:[%s2 + $0x4] sm:$0x1]
    %v51 = vld [vmem:[%s2 + $0x5] sm:$0x1]
    %v52 = vld [vmem:[%s2 + $0x6] sm:$0x1]
    %v53 = vld [vmem:[%s2 + $0x7] sm:$0x1]
    %v54 = vld [vmem:[#allocation5] sm:$0xf]
    %v55 = vld [vmem:[#allocation5 + $0x4] sm:$0xf]
    %v56 = vld [vmem:[#allocation5 + $0x8] sm:$0xf]
    %v57 = vld [vmem:[#allocation5 + $0xc] sm:$0xf]
    %v58 = vld [vmem:[#allocation5 + $0x10] sm:$0xf]
    %v59 = vld [vmem:[#allocation5 + $0x14] sm:$0xf]
    %v60 = vld [vmem:[#allocation5 + $0x18] sm:$0xf]
    %v61 = vld [vmem:[#allocation5 + $0x1c] sm:$0xf]
    %v62 = vld [vmem:[#allocation5 + $0x20] sm:$0xf]
    %v63 = vld [vmem:[#allocation5 + $0x24] sm:$0xf]
    %v64 = vld [vmem:[#allocation5 + $0x28] sm:$0xf]
    %v65 = vld [vmem:[#allocation5 + $0x2c] sm:$0xf]
    %v66 = vld [vmem:[#allocation5 + $0x30] sm:$0xf]
    %v67 = vld [vmem:[#allocation5 + $0x34] sm:$0xf]
    %v68 = vld [vmem:[#allocation5 + $0x38] sm:$0xf]
    %v69 = vld [vmem:[#allocation5 + $0x3c] sm:$0xf]
    %v70 = vld [vmem:[#allocation5 + $0x40] sm:$0xf]
    %v71 = vld [vmem:[#allocation5 + $0x44] sm:$0xf]
    %v72 = vld [vmem:[#allocation5 + $0x48] sm:$0xf]
    %v73 = vld [vmem:[#allocation5 + $0x4c] sm:$0xf]
    %v74 = vld [vmem:[#allocation5 + $0x50] sm:$0xf]
    %v75 = vld [vmem:[#allocation5 + $0x54] sm:$0xf]
    %v76 = vld [vmem:[#allocation5 + $0x58] sm:$0xf]
    %v77 = vld [vmem:[#allocation5 + $0x5c] sm:$0xf]
    %v78 = vld [vmem:[#allocation5 + $0x60] sm:$0xf]
    %v79 = vld [vmem:[#allocation5 + $0x64] sm:$0xf]
    %v80 = vld [vmem:[#allocation5 + $0x68] sm:$0xf]
    %v81 = vld [vmem:[#allocation5 + $0x6c] sm:$0xf]
    %vm82 = vcmask 261120
    %v83 = vsel %vm82, %v44, 0.0
    %84 = vadd.xlane.f32.xlu0 %v83
    %v85 = vpop.xlane.xlu0 %84
    %v86 = vsel %vm82, %v45, 0.0
    %87 = vadd.xlane.f32.xlu0 %v86
    %v88 = vpop.xlane.xlu0 %87
    %v89 = vrcp.pop 32.0
    %v90 = vmul.f32 %v85, %v89
    %v91 = vmul.f32 %v88, %v89
    %v92 = vsub.f32 %v44, %v90
    %v93 = vsub.f32 %v45, %v91
    %v94 = vmul.f32 %v92, %v92
    %v95 = vmul.f32 %v93, %v93
    %v96 = vsel %vm82, %v94, 0.0
    %97 = vadd.xlane.f32.xlu0 %v96
    %v98 = vpop.xlane.xlu0 %97
    %v99 = vsel %vm82, %v95, 0.0
    %100 = vadd.xlane.f32.xlu0 %v99
    %v101 = vpop.xlane.xlu0 %100
    %v102 = vmul.f32 %v98, %v89
    %v103 = vmul.f32 %v101, %v89
    %v104 = vadd.f32 %v102, 1e-05
    %v105 = vadd.f32 %v103, 1e-05
    %v106 = vrsqrt.pop %v104
    %v107 = vrsqrt.pop %v105
    %v108 = vmul.f32 %v92, %v106
    %v109 = vmul.f32 %v93, %v107
    %v110 = vlaneseq
    %v111 = vshrl.u32 %v110, 7
    %v112 = vsub.s32 0, %v111
    %v113 = vrot.slane %v46, %v112
    %v114 = vmul.f32 %v108, %v113
    %v115 = vmul.f32 %v109, %v113
    %v116 = vlaneseq
    %v117 = vshrl.u32 %v116, 7
    %v118 = vsub.s32 0, %v117
    %v119 = vrot.slane %v47, %v118
    %v120 = vadd.f32 %v114, %v119
    %v121 = vadd.f32 %v115, %v119
    %v122 = vpack.c.bf16 %v121, %v120
    %v123 = vlaneseq
    %v124 = vshrl.u32 %v123, 7
    %v125 = vsub.s32 0, %v124
    %v126 = vrot.slane %v48, %v125
    %v131 = vunpack.c.l.b16 %v54
    %v132 = vunpack.c.l.b16 %v55
    %v133 = vunpack.c.l.b16 %v56
    %v134 = vunpack.c.l.b16 %v57
    %v135 = vpack.c.b16 %v132, %v131
    %v136 = vpack.c.b16 %v134, %v133
    %v140 = vsel %vm82, %v122, 0
    %142 = vmatprep.subr.bf16.mxu0 0
    %143 = vmatpush1.bf16.msra.mxu0 %v135
    %144 = vmatprep.subr.bf16.mxu0 0
    %145 = vmatpush1.bf16.msra.mxu0 %v136
    %146 = vmatprep.subr.bf16.mxu0 0
    %147 = vmatpush1.bf16.msra.mxu0 0
    %148 = vmatprep.subr.bf16.mxu0 0
    %149 = vmatpush1.bf16.msra.mxu0 0
    %150 = vmatprep.subr.bf16.mxu0 0
    %151 = vmatpush1.bf16.msra.mxu0 0
    %152 = vmatprep.subr.bf16.mxu0 0
    %153 = vmatpush1.bf16.msra.mxu0 0
    %154 = vmatprep.subr.bf16.mxu0 0
    %155 = vmatpush1.bf16.msra.mxu0 0
    %156 = vmatprep.subr.bf16.mxu0 0
    %157 = vmatpush1.bf16.msra.mxu0 0
    %158 = vmatprep.subr.bf16.mxu0 0
    %159 = vmatpush1.bf16.msra.mxu0 0
    %160 = vmatprep.subr.bf16.mxu0 0
    %161 = vmatpush1.bf16.msra.mxu0 0
    %162 = vmatprep.subr.bf16.mxu0 0
    %163 = vmatpush1.bf16.msra.mxu0 0
    %164 = vmatprep.subr.bf16.mxu0 0
    %165 = vmatpush1.bf16.msra.mxu0 0
    %166 = vmatprep.subr.bf16.mxu0 0
    %167 = vmatpush1.bf16.msra.mxu0 0
    %168 = vmatprep.subr.bf16.mxu0 0
    %169 = vmatpush1.bf16.msra.mxu0 0
    %170 = vmatprep.subr.bf16.mxu0 0
    %171 = vmatpush1.bf16.msra.mxu0 0
    %172 = vmatprep.subr.bf16.mxu0 0
    %173 = vmatpush1.bf16.msra.mxu0 0
    %174 = vmatprep.mubr.bf16.mxu0 0
    %175 = vmatmul.mubr.bf16.gmra.mrb[0].mxu0 %v140
    %v176 = vpop.f32.mrb[0].mxu0
    %v177 = vadd.f32 %v126, %v176
    %v178 = vpop.f32.mrb[0].mxu0
    %v179 = vpop.f32.mrb[0].mxu0
    %v180 = vadd.f32 %v126, %v179
    %v181 = vpop.f32.mrb[0].mxu0
    %182 = vdwg.mxu0
    %v183 = vlaneseq
    %v184 = vshrl.u32 %v183, 7
    %v185 = vlaneseq
    %v186 = vand.u32 %v185, 127
    %vm187 = vcmp.ge.s32.totalorder %v184, %v186
    %v188 = vsel %vm187, 0.0, -inf
    %v189 = vpack.c.bf16 %v177, %v177
    %191 = vrot.lane.b32.xlu0 %v189, 96
    %v192 = vpop.permute.xlu0 %191
    %vm193 = vcmask 64512
    %v195 = vsel %vm193, %v189, 0
    %v198 = vsel %vm193, %v192, 0
    %200 = vmatprep.subr.bf16.mxu0 0
    %201 = vmatpush1.bf16.xpose.msra.mxu0 %v198
    %202 = vmatprep.subr.bf16.mxu0 0
    %203 = vmatpush1.bf16.xpose.msra.mxu0 0
    %204 = vmatprep.subr.bf16.mxu0 0
    %205 = vmatpush1.bf16.xpose.msra.mxu0 0
    %206 = vmatprep.subr.bf16.mxu0 0
    %207 = vmatpush1.bf16.xpose.msra.mxu0 0
    %208 = vmatprep.subr.bf16.mxu0 0
    %209 = vmatpush1.bf16.xpose.msra.mxu0 0
    %210 = vmatprep.subr.bf16.mxu0 0
    %211 = vmatpush1.bf16.xpose.msra.mxu0 0
    %212 = vmatprep.subr.bf16.mxu0 0
    %213 = vmatpush1.bf16.xpose.msra.mxu0 0
    %214 = vmatprep.subr.bf16.mxu0 0
    %215 = vmatpush1.bf16.xpose.msra.mxu0 0
    %216 = vmatprep.subr.bf16.mxu0 0
    %217 = vmatpush1.bf16.xpose.msra.mxu0 0
    %218 = vmatprep.subr.bf16.mxu0 0
    %219 = vmatpush1.bf16.xpose.msra.mxu0 0
    %220 = vmatprep.subr.bf16.mxu0 0
    %221 = vmatpush1.bf16.xpose.msra.mxu0 0
    %222 = vmatprep.subr.bf16.mxu0 0
    %223 = vmatpush1.bf16.xpose.msra.mxu0 0
    %224 = vmatprep.subr.bf16.mxu0 0
    %225 = vmatpush1.bf16.xpose.msra.mxu0 0
    %226 = vmatprep.subr.bf16.mxu0 0
    %227 = vmatpush1.bf16.xpose.msra.mxu0 0
    %228 = vmatprep.subr.bf16.mxu0 0
    %229 = vmatpush1.bf16.xpose.msra.mxu0 0
    %230 = vmatprep.subr.bf16.mxu0 0
    %231 = vmatpush1.bf16.xpose.msra.mxu0 0
    %232 = vmatprep.mubr.bf16.mxu0 0
    %233 = vmatmul.mubr.bf16.gmra.mrb[0].mxu0 %v195
    %v234 = vpop.f32.mrb[0].mxu0
    %v235 = vadd.f32 0.0, %v234
    %v236 = vpop.f32.mrb[0].mxu0
    %v237 = vpop.f32.mrb[0].mxu0
    %v238 = vpop.f32.mrb[0].mxu0
    %239 = vdwg.mxu0
    %v240 = vmul.f32 %v235, 0.35355338
    %v241 = vadd.f32 %v240, %v188
    %v242 = vsel %vm193, %v241, -inf
    %243 = vmax.xlane.f32.xlu0 %v242
    %v244 = vpop.xlane.xlu0 %243
    %v245 = vsub.f32 %v241, %v244
    %v246 = vmul.f32 %v245, 1.442695
    %v247 = vpow.pop %v246
    %v248 = vsel %vm193, %v247, 0.0
    %249 = vadd.xlane.f32.xlu0 %v248
    %v250 = vpop.xlane.xlu0 %249
    %v251 = vrcp.pop %v250
    %v252 = vmul.f32 %v247, %v251
    %v253 = vpack.c.bf16 %v252, %v252
    %254 = vrot.lane.b32.xlu0 %v189, 64
    %v255 = vpop.permute.xlu0 %254
    %v257 = vsel %vm193, %v253, 0
    %vm259 = vcmask 1043456
    %v261 = vsel %vm259, %v255, 0
    %263 = vmatprep.subr.bf16.mxu0 0
    %264 = vmatpush1.bf16.msra.mxu0 %v261
    %265 = vmatprep.subr.bf16.mxu0 0
    %266 = vmatpush1.bf16.msra.mxu0 0
    %267 = vmatprep.subr.bf16.mxu0 0
    %268 = vmatpush1.bf16.msra.mxu0 0
    %269 = vmatprep.subr.bf16.mxu0 0
    %270 = vmatpush1.bf16.msra.mxu0 0
    %271 = vmatprep.subr.bf16.mxu0 0
    %272 = vmatpush1.bf16.msra.mxu0 0
    %273 = vmatprep.subr.bf16.mxu0 0
    %274 = vmatpush1.bf16.msra.mxu0 0
    %275 = vmatprep.subr.bf16.mxu0 0
    %276 = vmatpush1.bf16.msra.mxu0 0
    %277 = vmatprep.subr.bf16.mxu0 0
    %278 = vmatpush1.bf16.msra.mxu0 0
    %279 = vmatprep.subr.bf16.mxu0 0
    %280 = vmatpush1.bf16.msra.mxu0 0
    %281 = vmatprep.subr.bf16.mxu0 0
    %282 = vmatpush1.bf16.msra.mxu0 0
    %283 = vmatprep.subr.bf16.mxu0 0
    %284 = vmatpush1.bf16.msra.mxu0 0
    %285 = vmatprep.subr.bf16.mxu0 0
    %286 = vmatpush1.bf16.msra.mxu0 0
    %287 = vmatprep.subr.bf16.mxu0 0
    %288 = vmatpush1.bf16.msra.mxu0 0
    %289 = vmatprep.subr.bf16.mxu0 0
    %290 = vmatpush1.bf16.msra.mxu0 0
    %291 = vmatprep.subr.bf16.mxu0 0
    %292 = vmatpush1.bf16.msra.mxu0 0
    %293 = vmatprep.subr.bf16.mxu0 0
    %294 = vmatpush1.bf16.msra.mxu0 0
    %295 = vmatprep.mubr.bf16.mxu0 0
    %296 = vmatmul.mubr.bf16.gmra.mrb[0].mxu0 %v257
    %v297 = vpop.f32.mrb[0].mxu0
    %v298 = vadd.f32 0.0, %v297
    %v299 = vpop.f32.mrb[0].mxu0
    %v300 = vpop.f32.mrb[0].mxu0
    %v301 = vpop.f32.mrb[0].mxu0
    %302 = vdwg.mxu0
    %303 = vrot.lane.b32.xlu0 %v189, 120
    %v304 = vpop.permute.xlu0 %303
    %305 = vrot.lane.b32.xlu0 %v189, 88
    %v306 = vpop.permute.xlu0 %305
    %v308 = vsel %vm193, %v304, 0
    %v311 = vsel %vm193, %v306, 0
    %313 = vmatprep.subr.bf16.mxu0 0
    %314 = vmatpush1.bf16.xpose.msra.mxu0 %v311
    %315 = vmatprep.subr.bf16.mxu0 0
    %316 = vmatpush1.bf16.xpose.msra.mxu0 0
    %317 = vmatprep.subr.bf16.mxu0 0
    %318 = vmatpush1.bf16.xpose.msra.mxu0 0
    %319 = vmatprep.subr.bf16.mxu0 0
    %320 = vmatpush1.bf16.xpose.msra.mxu0 0
    %321 = vmatprep.subr.bf16.mxu0 0
    %322 = vmatpush1.bf16.xpose.msra.mxu0 0
    %323 = vmatprep.subr.bf16.mxu0 0
    %324 = vmatpush1.bf16.xpose.msra.mxu0 0
    %325 = vmatprep.subr.bf16.mxu0 0
    %326 = vmatpush1.bf16.xpose.msra.mxu0 0
    %327 = vmatprep.subr.bf16.mxu0 0
    %328 = vmatpush1.bf16.xpose.msra.mxu0 0
    %329 = vmatprep.subr.bf16.mxu0 0
    %330 = vmatpush1.bf16.xpose.msra.mxu0 0
    %331 = vmatprep.subr.bf16.mxu0 0
    %332 = vmatpush1.bf16.xpose.msra.mxu0 0
    %333 = vmatprep.subr.bf16.mxu0 0
    %334 = vmatpush1.bf16.xpose.msra.mxu0 0
    %335 = vmatprep.subr.bf16.mxu0 0
    %336 = vmatpush1.bf16.xpose.msra.mxu0 0
    %337 = vmatprep.subr.bf16.mxu0 0
    %338 = vmatpush1.bf16.xpose.msra.mxu0 0
    %339 = vmatprep.subr.bf16.mxu0 0
    %340 = vmatpush1.bf16.xpose.msra.mxu0 0
    %341 = vmatprep.subr.bf16.mxu0 0
    %342 = vmatpush1.bf16.xpose.msra.mxu0 0
    %343 = vmatprep.subr.bf16.mxu0 0
    %344 = vmatpush1.bf16.xpose.msra.mxu0 0
    %345 = vmatprep.mubr.bf16.mxu0 0
    %346 = vmatmul.mubr.bf16.gmra.mrb[0].mxu0 %v308
    %v347 = vpop.f32.mrb[0].mxu0
    %v348 = vadd.f32 0.0, %v347
    %v349 = vpop.f32.mrb[0].mxu0
    %v350 = vpop.f32.mrb[0].mxu0
    %v351 = vpop.f32.mrb[0].mxu0
    %352 = vdwg.mxu0
    %v353 = vmul.f32 %v348, 0.35355338
    %v354 = vadd.f32 %v353, %v188
    %v355 = vsel %vm193, %v354, -inf
    %356 = vmax.xlane.f32.xlu0 %v355
    %v357 = vpop.xlane.xlu0 %356
    %v358 = vsub.f32 %v354, %v357
    %v359 = vmul.f32 %v358, 1.442695
    %v360 = vpow.pop %v359
    %v361 = vsel %vm193, %v360, 0.0
    %362 = vadd.xlane.f32.xlu0 %v361
    %v363 = vpop.xlane.xlu0 %362
    %v364 = vrcp.pop %v363
    %v365 = vmul.f32 %v360, %v364
    %v366 = vpack.c.bf16 %v365, %v365
    %367 = vrot.lane.b32.xlu0 %v189, 56
    %v368 = vpop.permute.xlu0 %367
    %v370 = vsel %vm193, %v366, 0
    %v373 = vsel %vm259, %v368, 0
    %375 = vmatprep.subr.bf16.mxu0 0
    %376 = vmatpush1.bf16.msra.mxu0 %v373
    %377 = vmatprep.subr.bf16.mxu0 0
    %378 = vmatpush1.bf16.msra.mxu0 0
    %379 = vmatprep.subr.bf16.mxu0 0
    %380 = vmatpush1.bf16.msra.mxu0 0
    %381 = vmatprep.subr.bf16.mxu0 0
    %382 = vmatpush1.bf16.msra.mxu0 0
    %383 = vmatprep.subr.bf16.mxu0 0
    %384 = vmatpush1.bf16.msra.mxu0 0
    %385 = vmatprep.subr.bf16.mxu0 0
    %386 = vmatpush1.bf16.msra.mxu0 0
    %387 = vmatprep.subr.bf16.mxu0 0
    %388 = vmatpush1.bf16.msra.mxu0 0
    %389 = vmatprep.subr.bf16.mxu0 0
    %390 = vmatpush1.bf16.msra.mxu0 0
    %391 = vmatprep.subr.bf16.mxu0 0
    %392 = vmatpush1.bf16.msra.mxu0 0
    %393 = vmatprep.subr.bf16.mxu0 0
    %394 = vmatpush1.bf16.msra.mxu0 0
    %395 = vmatprep.subr.bf16.mxu0 0
    %396 = vmatpush1.bf16.msra.mxu0 0
    %397 = vmatprep.subr.bf16.mxu0 0
    %398 = vmatpush1.bf16.msra.mxu0 0
    %399 = vmatprep.subr.bf16.mxu0 0
    %400 = vmatpush1.bf16.msra.mxu0 0
    %401 = vmatprep.subr.bf16.mxu0 0
    %402 = vmatpush1.bf16.msra.mxu0 0
    %403 = vmatprep.subr.bf16.mxu0 0
    %404 = vmatpush1.bf16.msra.mxu0 0
    %405 = vmatprep.subr.bf16.mxu0 0
    %406 = vmatpush1.bf16.msra.mxu0 0
    %407 = vmatprep.mubr.bf16.mxu0 0
    %408 = vmatmul.mubr.bf16.gmra.mrb[0].mxu0 %v370
    %v409 = vpop.f32.mrb[0].mxu0
    %v410 = vadd.f32 0.0, %v409
    %v411 = vpop.f32.mrb[0].mxu0
    %v412 = vpop.f32.mrb[0].mxu0
    %v413 = vpop.f32.mrb[0].mxu0
    %414 = vdwg.mxu0
    %415 = vrot.lane.b32.xlu0 %v189, 112
    %v416 = vpop.permute.xlu0 %415
    %417 = vrot.lane.b32.xlu0 %v189, 80
    %v418 = vpop.permute.xlu0 %417
    %v420 = vsel %vm193, %v416, 0
    %v423 = vsel %vm193, %v418, 0
    %425 = vmatprep.subr.bf16.mxu0 0
    %426 = vmatpush1.bf16.xpose.msra.mxu0 %v423
    %427 = vmatprep.subr.bf16.mxu0 0
    %428 = vmatpush1.bf16.xpose.msra.mxu0 0
    %429 = vmatprep.subr.bf16.mxu0 0
    %430 = vmatpush1.bf16.xpose.msra.mxu0 0
    %431 = vmatprep.subr.bf16.mxu0 0
    %432 = vmatpush1.bf16.xpose.msra.mxu0 0
    %433 = vmatprep.subr.bf16.mxu0 0
    %434 = vmatpush1.bf16.xpose.msra.mxu0 0
    %435 = vmatprep.subr.bf16.mxu0 0
    %436 = vmatpush1.bf16.xpose.msra.mxu0 0
    %437 = vmatprep.subr.bf16.mxu0 0
    %438 = vmatpush1.bf16.xpose.msra.mxu0 0
    %439 = vmatprep.subr.bf16.mxu0 0
    %440 = vmatpush1.bf16.xpose.msra.mxu0 0
    %441 = vmatprep.subr.bf16.mxu0 0
    %442 = vmatpush1.bf16.xpose.msra.mxu0 0
    %443 = vmatprep.subr.bf16.mxu0 0
    %444 = vmatpush1.bf16.xpose.msra.mxu0 0
    %445 = vmatprep.subr.bf16.mxu0 0
    %446 = vmatpush1.bf16.xpose.msra.mxu0 0
    %447 = vmatprep.subr.bf16.mxu0 0
    %448 = vmatpush1.bf16.xpose.msra.mxu0 0
    %449 = vmatprep.subr.bf16.mxu0 0
    %450 = vmatpush1.bf16.xpose.msra.mxu0 0
    %451 = vmatprep.subr.bf16.mxu0 0
    %452 = vmatpush1.bf16.xpose.msra.mxu0 0
    %453 = vmatprep.subr.bf16.mxu0 0
    %454 = vmatpush1.bf16.xpose.msra.mxu0 0
    %455 = vmatprep.subr.bf16.mxu0 0
    %456 = vmatpush1.bf16.xpose.msra.mxu0 0
    %457 = vmatprep.mubr.bf16.mxu0 0
    %458 = vmatmul.mubr.bf16.gmra.mrb[0].mxu0 %v420
    %v459 = vpop.f32.mrb[0].mxu0
    %v460 = vadd.f32 0.0, %v459
    %v461 = vpop.f32.mrb[0].mxu0
    %v462 = vpop.f32.mrb[0].mxu0
    %v463 = vpop.f32.mrb[0].mxu0
    %464 = vdwg.mxu0
    %v465 = vmul.f32 %v460, 0.35355338
    %v466 = vadd.f32 %v465, %v188
    %v467 = vsel %vm193, %v466, -inf
    %468 = vmax.xlane.f32.xlu0 %v467
    %v469 = vpop.xlane.xlu0 %468
    %v470 = vsub.f32 %v466, %v469
    %v471 = vmul.f32 %v470, 1.442695
    %v472 = vpow.pop %v471
    %v473 = vsel %vm193, %v472, 0.0
    %474 = vadd.xlane.f32.xlu0 %v473
    %v475 = vpop.xlane.xlu0 %474
    %v476 = vrcp.pop %v475
    %v477 = vmul.f32 %v472, %v476
    %v478 = vpack.c.bf16 %v477, %v477
    %479 = vrot.lane.b32.xlu0 %v189, 48
    %v480 = vpop.permute.xlu0 %479
    %v482 = vsel %vm193, %v478, 0
    %v485 = vsel %vm259, %v480, 0
    %487 = vmatprep.subr.bf16.mxu0 0
    %488 = vmatpush1.bf16.msra.mxu0 %v485
    %489 = vmatprep.subr.bf16.mxu0 0
    %490 = vmatpush1.bf16.msra.mxu0 0
    %491 = vmatprep.subr.bf16.mxu0 0
    %492 = vmatpush1.bf16.msra.mxu0 0
    %493 = vmatprep.subr.bf16.mxu0 0
    %494 = vmatpush1.bf16.msra.mxu0 0
    %495 = vmatprep.subr.bf16.mxu0 0
    %496 = vmatpush1.bf16.msra.mxu0 0
    %497 = vmatprep.subr.bf16.mxu0 0
    %498 = vmatpush1.bf16.msra.mxu0 0
    %499 = vmatprep.subr.bf16.mxu0 0
    %500 = vmatpush1.bf16.msra.mxu0 0
    %501 = vmatprep.subr.bf16.mxu0 0
    %502 = vmatpush1.bf16.msra.mxu0 0
    %503 = vmatprep.subr.bf16.mxu0 0
    %504 = vmatpush1.bf16.msra.mxu0 0
    %505 = vmatprep.subr.bf16.mxu0 0
    %506 = vmatpush1.bf16.msra.mxu0 0
    %507 = vmatprep.subr.bf16.mxu0 0
    %508 = vmatpush1.bf16.msra.mxu0 0
    %509 = vmatprep.subr.bf16.mxu0 0
    %510 = vmatpush1.bf16.msra.mxu0 0
    %511 = vmatprep.subr.bf16.mxu0 0
    %512 = vmatpush1.bf16.msra.mxu0 0
    %513 = vmatprep.subr.bf16.mxu0 0
    %514 = vmatpush1.bf16.msra.mxu0 0
    %515 = vmatprep.subr.bf16.mxu0 0
    %516 = vmatpush1.bf16.msra.mxu0 0
    %517 = vmatprep.subr.bf16.mxu0 0
    %518 = vmatpush1.bf16.msra.mxu0 0
    %519 = vmatprep.mubr.bf16.mxu0 0
    %520 = vmatmul.mubr.bf16.gmra.mrb[0].mxu0 %v482
    %v521 = vpop.f32.mrb[0].mxu0
    %v522 = vadd.f32 0.0, %v521
    %v523 = vpop.f32.mrb[0].mxu0
    %v524 = vpop.f32.mrb[0].mxu0
    %v525 = vpop.f32.mrb[0].mxu0
    %526 = vdwg.mxu0
    %527 = vrot.lane.b32.xlu0 %v189, 104
    %v528 = vpop.permute.xlu0 %527
    %529 = vrot.lane.b32.xlu0 %v189, 72
    %v530 = vpop.permute.xlu0 %529
    %v532 = vsel %vm193, %v528, 0
    %v535 = vsel %vm193, %v530, 0
    %537 = vmatprep.subr.bf16.mxu0 0
    %538 = vmatpush1.bf16.xpose.msra.mxu0 %v535
    %539 = vmatprep.subr.bf16.mxu0 0
    %540 = vmatpush1.bf16.xpose.msra.mxu0 0
    %541 = vmatprep.subr.bf16.mxu0 0
    %542 = vmatpush1.bf16.xpose.msra.mxu0 0
    %543 = vmatprep.subr.bf16.mxu0 0
    %544 = vmatpush1.bf16.xpose.msra.mxu0 0
    %545 = vmatprep.subr.bf16.mxu0 0
    %546 = vmatpush1.bf16.xpose.msra.mxu0 0
    %547 = vmatprep.subr.bf16.mxu0 0
    %548 = vmatpush1.bf16.xpose.msra.mxu0 0
    %549 = vmatprep.subr.bf16.mxu0 0
    %550 = vmatpush1.bf16.xpose.msra.mxu0 0
    %551 = vmatprep.subr.bf16.mxu0 0
    %552 = vmatpush1.bf16.xpose.msra.mxu0 0
    %553 = vmatprep.subr.bf16.mxu0 0
    %554 = vmatpush1.bf16.xpose.msra.mxu0 0
    %555 = vmatprep.subr.bf16.mxu0 0
    %556 = vmatpush1.bf16.xpose.msra.mxu0 0
    %557 = vmatprep.subr.bf16.mxu0 0
    %558 = vmatpush1.bf16.xpose.msra.mxu0 0
    %559 = vmatprep.subr.bf16.mxu0 0
    %560 = vmatpush1.bf16.xpose.msra.mxu0 0
    %561 = vmatprep.subr.bf16.mxu0 0
    %562 = vmatpush1.bf16.xpose.msra.mxu0 0
    %563 = vmatprep.subr.bf16.mxu0 0
    %564 = vmatpush1.bf16.xpose.msra.mxu0 0
    %565 = vmatprep.subr.bf16.mxu0 0
    %566 = vmatpush1.bf16.xpose.msra.mxu0 0
    %567 = vmatprep.subr.bf16.mxu0 0
    %568 = vmatpush1.bf16.xpose.msra.mxu0 0
    %569 = vmatprep.mubr.bf16.mxu0 0
    %570 = vmatmul.mubr.bf16.gmra.mrb[0].mxu0 %v532
    %v571 = vpop.f32.mrb[0].mxu0
    %v572 = vadd.f32 0.0, %v571
    %v573 = vpop.f32.mrb[0].mxu0
    %v574 = vpop.f32.mrb[0].mxu0
    %v575 = vpop.f32.mrb[0].mxu0
    %576 = vdwg.mxu0
    %v577 = vmul.f32 %v572, 0.35355338
    %v578 = vadd.f32 %v577, %v188
    %v579 = vsel %vm193, %v578, -inf
    %580 = vmax.xlane.f32.xlu0 %v579
    %v581 = vpop.xlane.xlu0 %580
    %v582 = vsub.f32 %v578, %v581
    %v583 = vmul.f32 %v582, 1.442695
    %v584 = vpow.pop %v583
    %v585 = vsel %vm193, %v584, 0.0
    %586 = vadd.xlane.f32.xlu0 %v585
    %v587 = vpop.xlane.xlu0 %586
    %v588 = vrcp.pop %v587
    %v589 = vmul.f32 %v584, %v588
    %v590 = vpack.c.bf16 %v589, %v589
    %591 = vrot.lane.b32.xlu0 %v189, 40
    %v592 = vpop.permute.xlu0 %591
    %v594 = vsel %vm193, %v590, 0
    %v597 = vsel %vm259, %v592, 0
    %599 = vmatprep.subr.bf16.mxu0 0
    %600 = vmatpush1.bf16.msra.mxu0 %v597
    %601 = vmatprep.subr.bf16.mxu0 0
    %602 = vmatpush1.bf16.msra.mxu0 0
    %603 = vmatprep.subr.bf16.mxu0 0
    %604 = vmatpush1.bf16.msra.mxu0 0
    %605 = vmatprep.subr.bf16.mxu0 0
    %606 = vmatpush1.bf16.msra.mxu0 0
    %607 = vmatprep.subr.bf16.mxu0 0
    %608 = vmatpush1.bf16.msra.mxu0 0
    %609 = vmatprep.subr.bf16.mxu0 0
    %610 = vmatpush1.bf16.msra.mxu0 0
    %611 = vmatprep.subr.bf16.mxu0 0
    %612 = vmatpush1.bf16.msra.mxu0 0
    %613 = vmatprep.subr.bf16.mxu0 0
    %614 = vmatpush1.bf16.msra.mxu0 0
    %615 = vmatprep.subr.bf16.mxu0 0
    %616 = vmatpush1.bf16.msra.mxu0 0
    %617 = vmatprep.subr.bf16.mxu0 0
    %618 = vmatpush1.bf16.msra.mxu0 0
    %619 = vmatprep.subr.bf16.mxu0 0
    %620 = vmatpush1.bf16.msra.mxu0 0
    %621 = vmatprep.subr.bf16.mxu0 0
    %622 = vmatpush1.bf16.msra.mxu0 0
    %623 = vmatprep.subr.bf16.mxu0 0
    %624 = vmatpush1.bf16.msra.mxu0 0
    %625 = vmatprep.subr.bf16.mxu0 0
    %626 = vmatpush1.bf16.msra.mxu0 0
    %627 = vmatprep.subr.bf16.mxu0 0
    %628 = vmatpush1.bf16.msra.mxu0 0
    %629 = vmatprep.subr.bf16.mxu0 0
    %630 = vmatpush1.bf16.msra.mxu0 0
    %631 = vmatprep.mubr.bf16.mxu0 0
    %632 = vmatmul.mubr.bf16.gmra.mrb[0].mxu0 %v594
    %v633 = vpop.f32.mrb[0].mxu0
    %v634 = vadd.f32 0.0, %v633
    %v635 = vpop.f32.mrb[0].mxu0
    %v636 = vpop.f32.mrb[0].mxu0
    %v637 = vpop.f32.mrb[0].mxu0
    %638 = vdwg.mxu0
    %640 = vrot.lane.b32.xlu0 %v410, 8
    %v641 = vpop.permute.xlu0 %640
    %644 = vrot.lane.b32.xlu0 %v522, 16
    %v645 = vpop.permute.xlu0 %644
    %648 = vrot.lane.b32.xlu0 %v634, 24
    %v649 = vpop.permute.xlu0 %648
    %v651 = vsel %vm193, %v298, %v641
    %vm652 = vcmask 130048
    %v653 = vsel %vm652, %v651, %v645
    %vm654 = vcmask 195584
    %v655 = vsel %vm654, %v653, %v649
    %v656 = vpack.c.bf16 %v180, %v180
    %658 = vrot.lane.b32.xlu0 %v656, 96
    %v659 = vpop.permute.xlu0 %658
    %v661 = vsel %vm193, %v656, 0
    %v664 = vsel %vm193, %v659, 0
    %666 = vmatprep.subr.bf16.mxu0 0
    %667 = vmatpush1.bf16.xpose.msra.mxu0 %v664
    %668 = vmatprep.subr.bf16.mxu0 0
    %669 = vmatpush1.bf16.xpose.msra.mxu0 0
    %670 = vmatprep.subr.bf16.mxu0 0
    %671 = vmatpush1.bf16.xpose.msra.mxu0 0
    %672 = vmatprep.subr.bf16.mxu0 0
    %673 = vmatpush1.bf16.xpose.msra.mxu0 0
    %674 = vmatprep.subr.bf16.mxu0 0
    %675 = vmatpush1.bf16.xpose.msra.mxu0 0
    %676 = vmatprep.subr.bf16.mxu0 0
    %677 = vmatpush1.bf16.xpose.msra.mxu0 0
    %678 = vmatprep.subr.bf16.mxu0 0
    %679 = vmatpush1.bf16.xpose.msra.mxu0 0
    %680 = vmatprep.subr.bf16.mxu0 0
    %681 = vmatpush1.bf16.xpose.msra.mxu0 0
    %682 = vmatprep.subr.bf16.mxu0 0
    %683 = vmatpush1.bf16.xpose.msra.mxu0 0
    %684 = vmatprep.subr.bf16.mxu0 0
    %685 = vmatpush1.bf16.xpose.msra.mxu0 0
    %686 = vmatprep.subr.bf16.mxu0 0
    %687 = vmatpush1.bf16.xpose.msra.mxu0 0
    %688 = vmatprep.subr.bf16.mxu0 0
    %689 = vmatpush1.bf16.xpose.msra.mxu0 0
    %690 = vmatprep.subr.bf16.mxu0 0
    %691 = vmatpush1.bf16.xpose.msra.mxu0 0
    %692 = vmatprep.subr.bf16.mxu0 0
    %693 = vmatpush1.bf16.xpose.msra.mxu0 0
    %694 = vmatprep.subr.bf16.mxu0 0
    %695 = vmatpush1.bf16.xpose.msra.mxu0 0
    %696 = vmatprep.subr.bf16.mxu0 0
    %697 = vmatpush1.bf16.xpose.msra.mxu0 0
    %698 = vmatprep.mubr.bf16.mxu0 0
    %699 = vmatmul.mubr.bf16.gmra.mrb[0].mxu0 %v661
    %v700 = vpop.f32.mrb[0].mxu0
    %v701 = vadd.f32 0.0, %v700
    %v702 = vpop.f32.mrb[0].mxu0
    %v703 = vpop.f32.mrb[0].mxu0
    %v704 = vpop.f32.mrb[0].mxu0
    %705 = vdwg.mxu0
    %v706 = vmul.f32 %v701, 0.35355338
    %v707 = vadd.f32 %v706, %v188
    %v708 = vsel %vm193, %v707, -inf
    %709 = vmax.xlane.f32.xlu0 %v708
    %v710 = vpop.xlane.xlu0 %709
    %v711 = vsub.f32 %v707, %v710
    %v712 = vmul.f32 %v711, 1.442695
    %v713 = vpow.pop %v712
    %v714 = vsel %vm193, %v713, 0.0
    %715 = vadd.xlane.f32.xlu0 %v714
    %v716 = vpop.xlane.xlu0 %715
    %v717 = vrcp.pop %v716
    %v718 = vmul.f32 %v713, %v717
    %v719 = vpack.c.bf16 %v718, %v718
    %720 = vrot.lane.b32.xlu0 %v656, 64
    %v721 = vpop.permute.xlu0 %720
    %v723 = vsel %vm193, %v719, 0
    %v726 = vsel %vm259, %v721, 0
    %728 = vmatprep.subr.bf16.mxu0 0
    %729 = vmatpush1.bf16.msra.mxu0 %v726
    %730 = vmatprep.subr.bf16.mxu0 0
    %731 = vmatpush1.bf16.msra.mxu0 0
    %732 = vmatprep.subr.bf16.mxu0 0
    %733 = vmatpush1.bf16.msra.mxu0 0
    %734 = vmatprep.subr.bf16.mxu0 0
    %735 = vmatpush1.bf16.msra.mxu0 0
    %736 = vmatprep.subr.bf16.mxu0 0
    %737 = vmatpush1.bf16.msra.mxu0 0
    %738 = vmatprep.subr.bf16.mxu0 0
    %739 = vmatpush1.bf16.msra.mxu0 0
    %740 = vmatprep.subr.bf16.mxu0 0
    %741 = vmatpush1.bf16.msra.mxu0 0
    %742 = vmatprep.subr.bf16.mxu0 0
    %743 = vmatpush1.bf16.msra.mxu0 0
    %744 = vmatprep.subr.bf16.mxu0 0
    %745 = vmatpush1.bf16.msra.mxu0 0
    %746 = vmatprep.subr.bf16.mxu0 0
    %747 = vmatpush1.bf16.msra.mxu0 0
    %748 = vmatprep.subr.bf16.mxu0 0
    %749 = vmatpush1.bf16.msra.mxu0 0
    %750 = vmatprep.subr.bf16.mxu0 0
    %751 = vmatpush1.bf16.msra.mxu0 0
    %752 = vmatprep.subr.bf16.mxu0 0
    %753 = vmatpush1.bf16.msra.mxu0 0
    %754 = vmatprep.subr.bf16.mxu0 0
    %755 = vmatpush1.bf16.msra.mxu0 0
    %756 = vmatprep.subr.bf16.mxu0 0
    %757 = vmatpush1.bf16.msra.mxu0 0
    %758 = vmatprep.subr.bf16.mxu0 0
    %759 = vmatpush1.bf16.msra.mxu0 0
    %760 = vmatprep.mubr.bf16.mxu0 0
    %761 = vmatmul.mubr.bf16.gmra.mrb[0].mxu0 %v723
    %v762 = vpop.f32.mrb[0].mxu0
    %v763 = vadd.f32 0.0, %v762
    %v764 = vpop.f32.mrb[0].mxu0
    %v765 = vpop.f32.mrb[0].mxu0
    %v766 = vpop.f32.mrb[0].mxu0
    %767 = vdwg.mxu0
    %768 = vrot.lane.b32.xlu0 %v656, 120
    %v769 = vpop.permute.xlu0 %768
    %770 = vrot.lane.b32.xlu0 %v656, 88
    %v771 = vpop.permute.xlu0 %770
    %v773 = vsel %vm193, %v769, 0
    %v776 = vsel %vm193, %v771, 0
    %778 = vmatprep.subr.bf16.mxu0 0
    %779 = vmatpush1.bf16.xpose.msra.mxu0 %v776
    %780 = vmatprep.subr.bf16.mxu0 0
    %781 = vmatpush1.bf16.xpose.msra.mxu0 0
    %782 = vmatprep.subr.bf16.mxu0 0
    %783 = vmatpush1.bf16.xpose.msra.mxu0 0
    %784 = vmatprep.subr.bf16.mxu0 0
    %785 = vmatpush1.bf16.xpose.msra.mxu0 0
    %786 = vmatprep.subr.bf16.mxu0 0
    %787 = vmatpush1.bf16.xpose.msra.mxu0 0
    %788 = vmatprep.subr.bf16.mxu0 0
    %789 = vmatpush1.bf16.xpose.msra.mxu0 0
    %790 = vmatprep.subr.bf16.mxu0 0
    %791 = vmatpush1.bf16.xpose.msra.mxu0 0
    %792 = vmatprep.subr.bf16.mxu0 0
    %793 = vmatpush1.bf16.xpose.msra.mxu0 0
    %794 = vmatprep.subr.bf16.mxu0 0
    %795 = vmatpush1.bf16.xpose.msra.mxu0 0
    %796 = vmatprep.subr.bf16.mxu0 0
    %797 = vmatpush1.bf16.xpose.msra.mxu0 0
    %798 = vmatprep.subr.bf16.mxu0 0
    %799 = vmatpush1.bf16.xpose.msra.mxu0 0
    %800 = vmatprep.subr.bf16.mxu0 0
    %801 = vmatpush1.bf16.xpose.msra.mxu0 0
    %802 = vmatprep.subr.bf16.mxu0 0
    %803 = vmatpush1.bf16.xpose.msra.mxu0 0
    %804 = vmatprep.subr.bf16.mxu0 0
    %805 = vmatpush1.bf16.xpose.msra.mxu0 0
    %806 = vmatprep.subr.bf16.mxu0 0
    %807 = vmatpush1.bf16.xpose.msra.mxu0 0
    %808 = vmatprep.subr.bf16.mxu0 0
    %809 = vmatpush1.bf16.xpose.msra.mxu0 0
    %810 = vmatprep.mubr.bf16.mxu0 0
    %811 = vmatmul.mubr.bf16.gmra.mrb[0].mxu0 %v773
    %v812 = vpop.f32.mrb[0].mxu0
    %v813 = vadd.f32 0.0, %v812
    %v814 = vpop.f32.mrb[0].mxu0
    %v815 = vpop.f32.mrb[0].mxu0
    %v816 = vpop.f32.mrb[0].mxu0
    %817 = vdwg.mxu0
    %v818 = vmul.f32 %v813, 0.35355338
    %v819 = vadd.f32 %v818, %v188
    %v820 = vsel %vm193, %v819, -inf
    %821 = vmax.xlane.f32.xlu0 %v820
    %v822 = vpop.xlane.xlu0 %821
    %v823 = vsub.f32 %v819, %v822
    %v824 = vmul.f32 %v823, 1.442695
    %v825 = vpow.pop %v824
    %v826 = vsel %vm193, %v825, 0.0
    %827 = vadd.xlane.f32.xlu0 %v826
    %v828 = vpop.xlane.xlu0 %827
    %v829 = vrcp.pop %v828
    %v830 = vmul.f32 %v825, %v829
    %v831 = vpack.c.bf16 %v830, %v830
    %832 = vrot.lane.b32.xlu0 %v656, 56
    %v833 = vpop.permute.xlu0 %832
    %v835 = vsel %vm193, %v831, 0
    %v838 = vsel %vm259, %v833, 0
    %840 = vmatprep.subr.bf16.mxu0 0
    %841 = vmatpush1.bf16.msra.mxu0 %v838
    %842 = vmatprep.subr.bf16.mxu0 0
    %843 = vmatpush1.bf16.msra.mxu0 0
    %844 = vmatprep.subr.bf16.mxu0 0
    %845 = vmatpush1.bf16.msra.mxu0 0
    %846 = vmatprep.subr.bf16.mxu0 0
    %847 = vmatpush1.bf16.msra.mxu0 0
    %848 = vmatprep.subr.bf16.mxu0 0
    %849 = vmatpush1.bf16.msra.mxu0 0
    %850 = vmatprep.subr.bf16.mxu0 0
    %851 = vmatpush1.bf16.msra.mxu0 0
    %852 = vmatprep.subr.bf16.mxu0 0
    %853 = vmatpush1.bf16.msra.mxu0 0
    %854 = vmatprep.subr.bf16.mxu0 0
    %855 = vmatpush1.bf16.msra.mxu0 0
    %856 = vmatprep.subr.bf16.mxu0 0
    %857 = vmatpush1.bf16.msra.mxu0 0
    %858 = vmatprep.subr.bf16.mxu0 0
    %859 = vmatpush1.bf16.msra.mxu0 0
    %860 = vmatprep.subr.bf16.mxu0 0
    %861 = vmatpush1.bf16.msra.mxu0 0
    %862 = vmatprep.subr.bf16.mxu0 0
    %863 = vmatpush1.bf16.msra.mxu0 0
    %864 = vmatprep.subr.bf16.mxu0 0
    %865 = vmatpush1.bf16.msra.mxu0 0
    %866 = vmatprep.subr.bf16.mxu0 0
    %867 = vmatpush1.bf16.msra.mxu0 0
    %868 = vmatprep.subr.bf16.mxu0 0
    %869 = vmatpush1.bf16.msra.mxu0 0
    %870 = vmatprep.subr.bf16.mxu0 0
    %871 = vmatpush1.bf16.msra.mxu0 0
    %872 = vmatprep.mubr.bf16.mxu0 0
    %873 = vmatmul.mubr.bf16.gmra.mrb[0].mxu0 %v835
    %v874 = vpop.f32.mrb[0].mxu0
    %v875 = vadd.f32 0.0, %v874
    %v876 = vpop.f32.mrb[0].mxu0
    %v877 = vpop.f32.mrb[0].mxu0
    %v878 = vpop.f32.mrb[0].mxu0
    %879 = vdwg.mxu0
    %880 = vrot.lane.b32.xlu0 %v656, 112
    %v881 = vpop.permute.xlu0 %880
    %882 = vrot.lane.b32.xlu0 %v656, 80
    %v883 = vpop.permute.xlu0 %882
    %v885 = vsel %vm193, %v881, 0
    %v888 = vsel %vm193, %v883, 0
    %890 = vmatprep.subr.bf16.mxu0 0
    %891 = vmatpush1.bf16.xpose.msra.mxu0 %v888
    %892 = vmatprep.subr.bf16.mxu0 0
    %893 = vmatpush1.bf16.xpose.msra.mxu0 0
    %894 = vmatprep.subr.bf16.mxu0 0
    %895 = vmatpush1.bf16.xpose.msra.mxu0 0
    %896 = vmatprep.subr.bf16.mxu0 0
    %897 = vmatpush1.bf16.xpose.msra.mxu0 0
    %898 = vmatprep.subr.bf16.mxu0 0
    %899 = vmatpush1.bf16.xpose.msra.mxu0 0
    %900 = vmatprep.subr.bf16.mxu0 0
    %901 = vmatpush1.bf16.xpose.msra.mxu0 0
    %902 = vmatprep.subr.bf16.mxu0 0
    %903 = vmatpush1.bf16.xpose.msra.mxu0 0
    %904 = vmatprep.subr.bf16.mxu0 0
    %905 = vmatpush1.bf16.xpose.msra.mxu0 0
    %906 = vmatprep.subr.bf16.mxu0 0
    %907 = vmatpush1.bf16.xpose.msra.mxu0 0
    %908 = vmatprep.subr.bf16.mxu0 0
    %909 = vmatpush1.bf16.xpose.msra.mxu0 0
    %910 = vmatprep.subr.bf16.mxu0 0
    %911 = vmatpush1.bf16.xpose.msra.mxu0 0
    %912 = vmatprep.subr.bf16.mxu0 0
    %913 = vmatpush1.bf16.xpose.msra.mxu0 0
    %914 = vmatprep.subr.bf16.mxu0 0
    %915 = vmatpush1.bf16.xpose.msra.mxu0 0
    %916 = vmatprep.subr.bf16.mxu0 0
    %917 = vmatpush1.bf16.xpose.msra.mxu0 0
    %918 = vmatprep.subr.bf16.mxu0 0
    %919 = vmatpush1.bf16.xpose.msra.mxu0 0
    %920 = vmatprep.subr.bf16.mxu0 0
    %921 = vmatpush1.bf16.xpose.msra.mxu0 0
    %922 = vmatprep.mubr.bf16.mxu0 0
    %923 = vmatmul.mubr.bf16.gmra.mrb[0].mxu0 %v885
    %v924 = vpop.f32.mrb[0].mxu0
    %v925 = vadd.f32 0.0, %v924
    %v926 = vpop.f32.mrb[0].mxu0
    %v927 = vpop.f32.mrb[0].mxu0
    %v928 = vpop.f32.mrb[0].mxu0
    %929 = vdwg.mxu0
    %v930 = vmul.f32 %v925, 0.35355338
    %v931 = vadd.f32 %v930, %v188
    %v932 = vsel %vm193, %v931, -inf
    %933 = vmax.xlane.f32.xlu0 %v932
    %v934 = vpop.xlane.xlu0 %933
    %v935 = vsub.f32 %v931, %v934
    %v936 = vmul.f32 %v935, 1.442695
    %v937 = vpow.pop %v936
    %v938 = vsel %vm193, %v937, 0.0
    %939 = vadd.xlane.f32.xlu0 %v938
    %v940 = vpop.xlane.xlu0 %939
    %v941 = vrcp.pop %v940
    %v942 = vmul.f32 %v937, %v941
    %v943 = vpack.c.bf16 %v942, %v942
    %944 = vrot.lane.b32.xlu0 %v656, 48
    %v945 = vpop.permute.xlu0 %944
    %v947 = vsel %vm193, %v943, 0
    %v950 = vsel %vm259, %v945, 0
    %952 = vmatprep.subr.bf16.mxu0 0
    %953 = vmatpush1.bf16.msra.mxu0 %v950
    %954 = vmatprep.subr.bf16.mxu0 0
    %955 = vmatpush1.bf16.msra.mxu0 0
    %956 = vmatprep.subr.bf16.mxu0 0
    %957 = vmatpush1.bf16.msra.mxu0 0
    %958 = vmatprep.subr.bf16.mxu0 0
    %959 = vmatpush1.bf16.msra.mxu0 0
    %960 = vmatprep.subr.bf16.mxu0 0
    %961 = vmatpush1.bf16.msra.mxu0 0
    %962 = vmatprep.subr.bf16.mxu0 0
    %963 = vmatpush1.bf16.msra.mxu0 0
    %964 = vmatprep.subr.bf16.mxu0 0
    %965 = vmatpush1.bf16.msra.mxu0 0
    %966 = vmatprep.subr.bf16.mxu0 0
    %967 = vmatpush1.bf16.msra.mxu0 0
    %968 = vmatprep.subr.bf16.mxu0 0
    %969 = vmatpush1.bf16.msra.mxu0 0
    %970 = vmatprep.subr.bf16.mxu0 0
    %971 = vmatpush1.bf16.msra.mxu0 0
    %972 = vmatprep.subr.bf16.mxu0 0
    %973 = vmatpush1.bf16.msra.mxu0 0
    %974 = vmatprep.subr.bf16.mxu0 0
    %975 = vmatpush1.bf16.msra.mxu0 0
    %976 = vmatprep.subr.bf16.mxu0 0
    %977 = vmatpush1.bf16.msra.mxu0 0
    %978 = vmatprep.subr.bf16.mxu0 0
    %979 = vmatpush1.bf16.msra.mxu0 0
    %980 = vmatprep.subr.bf16.mxu0 0
    %981 = vmatpush1.bf16.msra.mxu0 0
    %982 = vmatprep.subr.bf16.mxu0 0
    %983 = vmatpush1.bf16.msra.mxu0 0
    %984 = vmatprep.mubr.bf16.mxu0 0
    %985 = vmatmul.mubr.bf16.gmra.mrb[0].mxu0 %v947
    %v986 = vpop.f32.mrb[0].mxu0
    %v987 = vadd.f32 0.0, %v986
    %v988 = vpop.f32.mrb[0].mxu0
    %v989 = vpop.f32.mrb[0].mxu0
    %v990 = vpop.f32.mrb[0].mxu0
    %991 = vdwg.mxu0
    %992 = vrot.lane.b32.xlu0 %v656, 104
    %v993 = vpop.permute.xlu0 %992
    %994 = vrot.lane.b32.xlu0 %v656, 72
    %v995 = vpop.permute.xlu0 %994
    %v997 = vsel %vm193, %v993, 0
    %v1000 = vsel %vm193, %v995, 0
    %1002 = vmatprep.subr.bf16.mxu0 0
    %1003 = vmatpush1.bf16.xpose.msra.mxu0 %v1000
    %1004 = vmatprep.subr.bf16.mxu0 0
    %1005 = vmatpush1.bf16.xpose.msra.mxu0 0
    %1006 = vmatprep.subr.bf16.mxu0 0
    %1007 = vmatpush1.bf16.xpose.msra.mxu0 0
    %1008 = vmatprep.subr.bf16.mxu0 0
    %1009 = vmatpush1.bf16.xpose.msra.mxu0 0
    %1010 = vmatprep.subr.bf16.mxu0 0
    %1011 = vmatpush1.bf16.xpose.msra.mxu0 0
    %1012 = vmatprep.subr.bf16.mxu0 0
    %1013 = vmatpush1.bf16.xpose.msra.mxu0 0
    %1014 = vmatprep.subr.bf16.mxu0 0
    %1015 = vmatpush1.bf16.xpose.msra.mxu0 0
    %1016 = vmatprep.subr.bf16.mxu0 0
    %1017 = vmatpush1.bf16.xpose.msra.mxu0 0
    %1018 = vmatprep.subr.bf16.mxu0 0
    %1019 = vmatpush1.bf16.xpose.msra.mxu0 0
    %1020 = vmatprep.subr.bf16.mxu0 0
    %1021 = vmatpush1.bf16.xpose.msra.mxu0 0
    %1022 = vmatprep.subr.bf16.mxu0 0
    %1023 = vmatpush1.bf16.xpose.msra.mxu0 0
    %1024 = vmatprep.subr.bf16.mxu0 0
    %1025 = vmatpush1.bf16.xpose.msra.mxu0 0
    %1026 = vmatprep.subr.bf16.mxu0 0
    %1027 = vmatpush1.bf16.xpose.msra.mxu0 0
    %1028 = vmatprep.subr.bf16.mxu0 0
    %1029 = vmatpush1.bf16.xpose.msra.mxu0 0
    %1030 = vmatprep.subr.bf16.mxu0 0
    %1031 = vmatpush1.bf16.xpose.msra.mxu0 0
    %1032 = vmatprep.subr.bf16.mxu0 0
    %1033 = vmatpush1.bf16.xpose.msra.mxu0 0
    %1034 = vmatprep.mubr.bf16.mxu0 0
    %1035 = vmatmul.mubr.bf16.gmra.mrb[0].mxu0 %v997
    %v1036 = vpop.f32.mrb[0].mxu0
    %v1037 = vadd.f32 0.0, %v1036
    %v1038 = vpop.f32.mrb[0].mxu0
    %v1039 = vpop.f32.mrb[0].mxu0
    %v1040 = vpop.f32.mrb[0].mxu0
    %1041 = vdwg.mxu0
    %v1042 = vmul.f32 %v1037, 0.35355338
    %v1043 = vadd.f32 %v1042, %v188
    %v1044 = vsel %vm193, %v1043, -inf
    %1045 = vmax.xlane.f32.xlu0 %v1044
    %v1046 = vpop.xlane.xlu0 %1045
    %v1047 = vsub.f32 %v1043, %v1046
    %v1048 = vmul.f32 %v1047, 1.442695
    %v1049 = vpow.pop %v1048
    %v1050 = vsel %vm193, %v1049, 0.0
    %1051 = vadd.xlane.f32.xlu0 %v1050
    %v1052 = vpop.xlane.xlu0 %1051
    %v1053 = vrcp.pop %v1052
    %v1054 = vmul.f32 %v1049, %v1053
    %v1055 = vpack.c.bf16 %v1054, %v1054
    %1056 = vrot.lane.b32.xlu0 %v656, 40
    %v1057 = vpop.permute.xlu0 %1056
    %v1059 = vsel %vm193, %v1055, 0
    %v1062 = vsel %vm259, %v1057, 0
    %1064 = vmatprep.subr.bf16.mxu0 0
    %1065 = vmatpush1.bf16.msra.mxu0 %v1062
    %1066 = vmatprep.subr.bf16.mxu0 0
    %1067 = vmatpush1.bf16.msra.mxu0 0
    %1068 = vmatprep.subr.bf16.mxu0 0
    %1069 = vmatpush1.bf16.msra.mxu0 0
    %1070 = vmatprep.subr.bf16.mxu0 0
    %1071 = vmatpush1.bf16.msra.mxu0 0
    %1072 = vmatprep.subr.bf16.mxu0 0
    %1073 = vmatpush1.bf16.msra.mxu0 0
    %1074 = vmatprep.subr.bf16.mxu0 0
    %1075 = vmatpush1.bf16.msra.mxu0 0
    %1076 = vmatprep.subr.bf16.mxu0 0
    %1077 = vmatpush1.bf16.msra.mxu0 0
    %1078 = vmatprep.subr.bf16.mxu0 0
    %1079 = vmatpush1.bf16.msra.mxu0 0
    %1080 = vmatprep.subr.bf16.mxu0 0
    %1081 = vmatpush1.bf16.msra.mxu0 0
    %1082 = vmatprep.subr.bf16.mxu0 0
    %1083 = vmatpush1.bf16.msra.mxu0 0
    %1084 = vmatprep.subr.bf16.mxu0 0
    %1085 = vmatpush1.bf16.msra.mxu0 0
    %1086 = vmatprep.subr.bf16.mxu0 0
    %1087 = vmatpush1.bf16.msra.mxu0 0
    %1088 = vmatprep.subr.bf16.mxu0 0
    %1089 = vmatpush1.bf16.msra.mxu0 0
    %1090 = vmatprep.subr.bf16.mxu0 0
    %1091 = vmatpush1.bf16.msra.mxu0 0
    %1092 = vmatprep.subr.bf16.mxu0 0
    %1093 = vmatpush1.bf16.msra.mxu0 0
    %1094 = vmatprep.subr.bf16.mxu0 0
    %1095 = vmatpush1.bf16.msra.mxu0 0
    %1096 = vmatprep.mubr.bf16.mxu0 0
    %1097 = vmatmul.mubr.bf16.gmra.mrb[0].mxu0 %v1059
    %v1098 = vpop.f32.mrb[0].mxu0
    %v1099 = vadd.f32 0.0, %v1098
    %v1100 = vpop.f32.mrb[0].mxu0
    %v1101 = vpop.f32.mrb[0].mxu0
    %v1102 = vpop.f32.mrb[0].mxu0
    %1103 = vdwg.mxu0
    %1105 = vrot.lane.b32.xlu0 %v875, 8
    %v1106 = vpop.permute.xlu0 %1105
    %1109 = vrot.lane.b32.xlu0 %v987, 16
    %v1110 = vpop.permute.xlu0 %1109
    %1113 = vrot.lane.b32.xlu0 %v1099, 24
    %v1114 = vpop.permute.xlu0 %1113
    %v1116 = vsel %vm193, %v763, %v1106
    %v1117 = vsel %vm652, %v1116, %v1110
    %v1118 = vsel %vm654, %v1117, %v1114
    %v1119 = vpack.c.bf16 %v1118, %v655
    %v1120 = vlaneseq
    %v1121 = vshrl.u32 %v1120, 7
    %v1122 = vsub.s32 0, %v1121
    %v1123 = vrot.slane %v49, %v1122
    %v1128 = vunpack.c.l.b16 %v78
    %v1129 = vunpack.c.l.b16 %v79
    %v1130 = vunpack.c.l.b16 %v80
    %v1131 = vunpack.c.l.b16 %v81
    %v1132 = vpack.c.b16 %v1129, %v1128
    %v1133 = vpack.c.b16 %v1131, %v1130
    %v1137 = vsel %vm82, %v1119, 0
    %1139 = vmatprep.subr.bf16.mxu0 0
    %1140 = vmatpush1.bf16.msra.mxu0 %v1132
    %1141 = vmatprep.subr.bf16.mxu0 0
    %1142 = vmatpush1.bf16.msra.mxu0 %v1133
    %1143 = vmatprep.subr.bf16.mxu0 0
    %1144 = vmatpush1.bf16.msra.mxu0 0
    %1145 = vmatprep.subr.bf16.mxu0 0
    %1146 = vmatpush1.bf16.msra.mxu0 0
    %1147 = vmatprep.subr.bf16.mxu0 0
    %1148 = vmatpush1.bf16.msra.mxu0 0
    %1149 = vmatprep.subr.bf16.mxu0 0
    %1150 = vmatpush1.bf16.msra.mxu0 0
    %1151 = vmatprep.subr.bf16.mxu0 0
    %1152 = vmatpush1.bf16.msra.mxu0 0
    %1153 = vmatprep.subr.bf16.mxu0 0
    %1154 = vmatpush1.bf16.msra.mxu0 0
    %1155 = vmatprep.subr.bf16.mxu0 0
    %1156 = vmatpush1.bf16.msra.mxu0 0
    %1157 = vmatprep.subr.bf16.mxu0 0
    %1158 = vmatpush1.bf16.msra.mxu0 0
    %1159 = vmatprep.subr.bf16.mxu0 0
    %1160 = vmatpush1.bf16.msra.mxu0 0
    %1161 = vmatprep.subr.bf16.mxu0 0
    %1162 = vmatpush1.bf16.msra.mxu0 0
    %1163 = vmatprep.subr.bf16.mxu0 0
    %1164 = vmatpush1.bf16.msra.mxu0 0
    %1165 = vmatprep.subr.bf16.mxu0 0
    %1166 = vmatpush1.bf16.msra.mxu0 0
    %1167 = vmatprep.subr.bf16.mxu0 0
    %1168 = vmatpush1.bf16.msra.mxu0 0
    %1169 = vmatprep.subr.bf16.mxu0 0
    %1170 = vmatpush1.bf16.msra.mxu0 0
    %1171 = vmatprep.mubr.bf16.mxu0 0
    %1172 = vmatmul.mubr.bf16.gmra.mrb[0].mxu0 %v1137
    %v1173 = vpop.f32.mrb[0].mxu0
    %v1174 = vadd.f32 %v1123, %v1173
    %v1175 = vpop.f32.mrb[0].mxu0
    %v1176 = vpop.f32.mrb[0].mxu0
    %v1177 = vadd.f32 %v1123, %v1176
    %v1178 = vpop.f32.mrb[0].mxu0
    %1179 = vdwg.mxu0
    %v1180 = vadd.f32 %v44, %v1174
    %v1181 = vadd.f32 %v45, %v1177
    %v1182 = vsel %vm82, %v1180, 0.0
    %1183 = vadd.xlane.f32.xlu0 %v1182
    %v1184 = vpop.xlane.xlu0 %1183
    %v1185 = vsel %vm82, %v1181, 0.0
    %1186 = vadd.xlane.f32.xlu0 %v1185
    %v1187 = vpop.xlane.xlu0 %1186
    %v1188 = vmul.f32 %v1184, %v89
    %v1189 = vmul.f32 %v1187, %v89
    %v1190 = vsub.f32 %v1180, %v1188
    %v1191 = vsub.f32 %v1181, %v1189
    %v1192 = vmul.f32 %v1190, %v1190
    %v1193 = vmul.f32 %v1191, %v1191
    %v1194 = vsel %vm82, %v1192, 0.0
    %1195 = vadd.xlane.f32.xlu0 %v1194
    %v1196 = vpop.xlane.xlu0 %1195
    %v1197 = vsel %vm82, %v1193, 0.0
    %1198 = vadd.xlane.f32.xlu0 %v1197
    %v1199 = vpop.xlane.xlu0 %1198
    %v1200 = vmul.f32 %v1196, %v89
    %v1201 = vmul.f32 %v1199, %v89
    %v1202 = vadd.f32 %v1200, 1e-05
    %v1203 = vadd.f32 %v1201, 1e-05
    %v1204 = vrsqrt.pop %v1202
    %v1205 = vrsqrt.pop %v1203
    %v1206 = vmul.f32 %v1190, %v1204
    %v1207 = vmul.f32 %v1191, %v1205
    %v1208 = vlaneseq
    %v1209 = vshrl.u32 %v1208, 7
    %v1210 = vsub.s32 0, %v1209
    %v1211 = vrot.slane %v50, %v1210
    %v1212 = vmul.f32 %v1206, %v1211
    %v1213 = vmul.f32 %v1207, %v1211
    %v1214 = vlaneseq
    %v1215 = vshrl.u32 %v1214, 7
    %v1216 = vsub.s32 0, %v1215
    %v1217 = vrot.slane %v51, %v1216
    %v1218 = vadd.f32 %v1212, %v1217
    %v1219 = vadd.f32 %v1213, %v1217
    %v1220 = vpack.c.bf16 %v1219, %v1218
    %v1221 = vlaneseq
    %v1222 = vshrl.u32 %v1221, 7
    %v1223 = vsub.s32 0, %v1222
    %v1224 = vrot.slane %v52, %v1223
    %v1229 = vunpack.c.l.b16 %v58
    %v1230 = vunpack.c.l.b16 %v59
    %v1231 = vunpack.c.l.b16 %v60
    %v1232 = vunpack.c.l.b16 %v61
    %v1233 = vpack.c.b16 %v1230, %v1229
    %v1234 = vpack.c.b16 %v1232, %v1231
    %v1238 = vsel %vm82, %v1220, 0
    %1240 = vmatprep.subr.bf16.mxu0 0
    %1241 = vmatpush1.bf16.msra.mxu0 %v1233
    %1242 = vmatprep.subr.bf16.mxu0 0
    %1243 = vmatpush1.bf16.msra.mxu0 %v1234
    %1244 = vmatprep.subr.bf16.mxu0 0
    %1245 = vmatpush1.bf16.msra.mxu0 0
    %1246 = vmatprep.subr.bf16.mxu0 0
    %1247 = vmatpush1.bf16.msra.mxu0 0
    %1248 = vmatprep.subr.bf16.mxu0 0
    %1249 = vmatpush1.bf16.msra.mxu0 0
    %1250 = vmatprep.subr.bf16.mxu0 0
    %1251 = vmatpush1.bf16.msra.mxu0 0
    %1252 = vmatprep.subr.bf16.mxu0 0
    %1253 = vmatpush1.bf16.msra.mxu0 0
    %1254 = vmatprep.subr.bf16.mxu0 0
    %1255 = vmatpush1.bf16.msra.mxu0 0
    %1256 = vmatprep.subr.bf16.mxu0 0
    %1257 = vmatpush1.bf16.msra.mxu0 0
    %1258 = vmatprep.subr.bf16.mxu0 0
    %1259 = vmatpush1.bf16.msra.mxu0 0
    %1260 = vmatprep.subr.bf16.mxu0 0
    %1261 = vmatpush1.bf16.msra.mxu0 0
    %1262 = vmatprep.subr.bf16.mxu0 0
    %1263 = vmatpush1.bf16.msra.mxu0 0
    %1264 = vmatprep.subr.bf16.mxu0 0
    %1265 = vmatpush1.bf16.msra.mxu0 0
    %1266 = vmatprep.subr.bf16.mxu0 0
    %1267 = vmatpush1.bf16.msra.mxu0 0
    %1268 = vmatprep.subr.bf16.mxu0 0
    %1269 = vmatpush1.bf16.msra.mxu0 0
    %1270 = vmatprep.subr.bf16.mxu0 0
    %1271 = vmatpush1.bf16.msra.mxu0 0
    %1272 = vmatprep.mubr.bf16.mxu0 0
    %1273 = vmatmul.mubr.bf16.gmra.mrb[0].mxu0 %v1238
    %v1274 = vpop.f32.mrb[0].mxu0
    %v1275 = vadd.f32 %v1224, %v1274
    %v1276 = vpop.f32.mrb[0].mxu0
    %v1277 = vpop.f32.mrb[0].mxu0
    %v1278 = vadd.f32 %v1224, %v1277
    %v1279 = vpop.f32.mrb[0].mxu0
    %1280 = vdwg.mxu0
    %v1281 = vmul.f32 %v1275, 0.5
    %v1282 = vmul.f32 %v1278, 0.5
    %v1283 = vmul.f32 %v1275, 0.70710677
    %v1284 = vmul.f32 %v1278, 0.70710677
    %v1285 = verf.f32.pop %v1283
    %v1286 = verf.f32.pop %v1284
    %v1287 = vadd.f32 %v1285, 1.0
    %v1288 = vadd.f32 %v1286, 1.0
    %v1289 = vmul.f32 %v1281, %v1287
    %v1290 = vmul.f32 %v1282, %v1288
    %v1291 = vpack.c.bf16 %v1290, %v1289
    %v1292 = vlaneseq
    %v1293 = vshrl.u32 %v1292, 7
    %v1294 = vsub.s32 0, %v1293
    %v1295 = vrot.slane %v53, %v1294
    %v1312 = vunpack.c.l.b16 %v62
    %v1313 = vunpack.c.l.b16 %v63
    %v1314 = vunpack.c.l.b16 %v64
    %v1315 = vunpack.c.l.b16 %v65
    %v1316 = vunpack.c.l.b16 %v66
    %v1317 = vunpack.c.l.b16 %v67
    %v1318 = vunpack.c.l.b16 %v68
    %v1319 = vunpack.c.l.b16 %v69
    %v1320 = vunpack.c.l.b16 %v70
    %v1321 = vunpack.c.l.b16 %v71
    %v1322 = vunpack.c.l.b16 %v72
    %v1323 = vunpack.c.l.b16 %v73
    %v1324 = vunpack.c.l.b16 %v74
    %v1325 = vunpack.c.l.b16 %v75
    %v1326 = vunpack.c.l.b16 %v76
    %v1327 = vunpack.c.l.b16 %v77
    %v1328 = vpack.c.b16 %v1313, %v1312
    %v1329 = vpack.c.b16 %v1315, %v1314
    %v1330 = vpack.c.b16 %v1317, %v1316
    %v1331 = vpack.c.b16 %v1319, %v1318
    %v1332 = vpack.c.b16 %v1321, %v1320
    %v1333 = vpack.c.b16 %v1323, %v1322
    %v1334 = vpack.c.b16 %v1325, %v1324
    %v1335 = vpack.c.b16 %v1327, %v1326
    %1344 = vmatprep.subr.bf16.mxu0 0
    %1345 = vmatpush1.bf16.msra.mxu0 %v1328
    %1346 = vmatprep.subr.bf16.mxu0 0
    %1347 = vmatpush1.bf16.msra.mxu0 %v1329
    %1348 = vmatprep.subr.bf16.mxu0 0
    %1349 = vmatpush1.bf16.msra.mxu0 %v1330
    %1350 = vmatprep.subr.bf16.mxu0 0
    %1351 = vmatpush1.bf16.msra.mxu0 %v1331
    %1352 = vmatprep.subr.bf16.mxu0 0
    %1353 = vmatpush1.bf16.msra.mxu0 %v1332
    %1354 = vmatprep.subr.bf16.mxu0 0
    %1355 = vmatpush1.bf16.msra.mxu0 %v1333
    %1356 = vmatprep.subr.bf16.mxu0 0
    %1357 = vmatpush1.bf16.msra.mxu0 %v1334
    %1358 = vmatprep.subr.bf16.mxu0 0
    %1359 = vmatpush1.bf16.msra.mxu0 %v1335
    %1360 = vmatprep.subr.bf16.mxu0 0
    %1361 = vmatpush1.bf16.msra.mxu0 0
    %1362 = vmatprep.subr.bf16.mxu0 0
    %1363 = vmatpush1.bf16.msra.mxu0 0
    %1364 = vmatprep.subr.bf16.mxu0 0
    %1365 = vmatpush1.bf16.msra.mxu0 0
    %1366 = vmatprep.subr.bf16.mxu0 0
    %1367 = vmatpush1.bf16.msra.mxu0 0
    %1368 = vmatprep.subr.bf16.mxu0 0
    %1369 = vmatpush1.bf16.msra.mxu0 0
    %1370 = vmatprep.subr.bf16.mxu0 0
    %1371 = vmatpush1.bf16.msra.mxu0 0
    %1372 = vmatprep.subr.bf16.mxu0 0
    %1373 = vmatpush1.bf16.msra.mxu0 0
    %1374 = vmatprep.subr.bf16.mxu0 0
    %1375 = vmatpush1.bf16.msra.mxu0 0
    %1376 = vmatprep.mubr.bf16.mxu0 0
    %1377 = vmatmul.mubr.bf16.gmra.mrb[0].mxu0 %v1291
    %v1378 = vpop.f32.mrb[0].mxu0
    %v1379 = vadd.f32 %v1295, %v1378
    %v1380 = vpop.f32.mrb[0].mxu0
    %v1381 = vpop.f32.mrb[0].mxu0
    %v1382 = vadd.f32 %v1295, %v1381
    %v1383 = vpop.f32.mrb[0].mxu0
    %1384 = vdwg.mxu0
    %v1385 = vadd.f32 %v1180, %v1379
    %v1386 = vadd.f32 %v1181, %v1382
    %1387 = vst.msk [vmem:[#allocation7] sm:$0xff] %vm82, %v1385
    %1388 = vst.msk [vmem:[#allocation7 + $0x8] sm:$0xff] %vm82, %v1386
    // Predicated region
    $region22: #{block_forward.1} parent=1 // pred_check
      _
    $region23: #{block_forward.1} parent=1 // pred_check_branch
      %1390 = sbr.rel (0) target = $region25
    $region24: #{block_forward.1} parent=1 // pred_region
      %s1392 = ssub.s32 256, 256
      %1393 = vsyncadd [#allocation4], %s1392
      %s1394 = sshll.u32 [#allocation7], 4
      %s1395 = int_to_ptr.vmem [resolvable:$true] %s1394
      %1400 = dma.vmem_to_hbm [thread:$0]  %s1395, 256, %s3, [#allocation4], 128, 128, 8
    $region25: #{block_forward.1} parent=1 // pred_fallthru
      _
    // Predicated region
    $region26: #{block_forward.1} parent=1 // pred_check
      _
    $region27: #{block_forward.1} parent=1 // pred_check_branch
      %1402 = sbr.rel (0) target = $region29
    $region28: #{block_forward.1} parent=1 // pred_region
      %1403 = dma.done [#allocation4], 256
    $region29: #{block_forward.1} parent=1 // pred_fallthru
      _
    %1404 = vsyncpa [#allocation3], 1
    %1405 = vsyncpa [#allocation6], 1
    %1406 = vsyncpa [#allocation4], 1

</llo_original>
